<compile_context>
chip_gen: v6e
topology: v6e:2x2x1
jax: 0.10.0
libtpu: 0.0.40
codegen_flags: <defaults>
</compile_context>

<pallas_src>
import functools

import jax
import jax.numpy as jnp
from jax import lax
from jax.experimental import pallas as pl
from jax.experimental.pallas import tpu as pltpu

IN_CH = 3          # in_channels
OUT_CH = 1         # out_channels
SPACE_DIM = 2      # space_dimensions
PROP_DIM = 3       # propagate_dimensions
K = 10             # k nearest neighbours

# Flat SMEM parameter layout (all f32). lin_s bias is intentionally omitted:
# it cancels in s_i - s_j.
OFF_WS = 0                            # lin_s weight  [IN_CH, SPACE_DIM]  (c*S + a)
OFF_WH = OFF_WS + IN_CH * SPACE_DIM   # lin_h weight  [IN_CH, PROP_DIM]   (c*P + p)
OFF_BH = OFF_WH + IN_CH * PROP_DIM    # lin_h bias    [PROP_DIM]
OFF_WO1 = OFF_BH + PROP_DIM           # lin_out1 w    [IN_CH]             (no bias)
OFF_WO2 = OFF_WO1 + IN_CH             # lin_out2 w    [2*PROP_DIM]        (mean then max)
OFF_BO2 = OFF_WO2 + 2 * PROP_DIM      # lin_out2 bias [1]
N_PARAMS = OFF_BO2 + 1                # = 28

BIG = 1e30


def gravnet_kernel(x_ref, w_ref, out_ref, *, num_graphs, nodes_per_graph):
    """x_ref: [Ntot, IN_CH] f32 (VMEM), w_ref: [N_PARAMS] f32 (SMEM),
    out_ref: [1, Ntot] f32 (VMEM, lane-dense over target nodes)."""
    x = x_ref[...]                                    # [Ntot, C], node index on sublanes
    ntot = num_graphs * nodes_per_graph

    # 2-D index helpers: rows (sublanes) = neighbour j, cols (lanes) = target i.
    jj = lax.broadcasted_iota(jnp.int32, (ntot, ntot), 0)
    ii = lax.broadcasted_iota(jnp.int32, (ntot, ntot), 1)
    eyef = jnp.where(jj == ii, 1.0, 0.0)              # identity mask, f32

    # Per-channel column form [Ntot, 1] straight from x, and lane-dense row
    # form [1, Ntot] built in-kernel via identity-mask + sublane reduce
    # (a tiny "transpose" using only well-supported VPU/XLU ops).
    x_cols = [x[:, c:c + 1] for c in range(IN_CH)]
    x_rows = [jnp.sum(xc * eyef, axis=0, keepdims=True) for xc in x_cols]

    # ---- learned coordinates s; d2[j, i] = ||s_i - s_j||^2 (bias cancels).
    d2 = None
    for a in range(SPACE_DIM):
        s_col = x_cols[0] * w_ref[OFF_WS + 0 * SPACE_DIM + a]       # s_j  [Ntot, 1]
        s_row = x_rows[0] * w_ref[OFF_WS + 0 * SPACE_DIM + a]       # s_i  [1, Ntot]
        for c in range(1, IN_CH):
            s_col = s_col + x_cols[c] * w_ref[OFF_WS + c * SPACE_DIM + a]
            s_row = s_row + x_rows[c] * w_ref[OFF_WS + c * SPACE_DIM + a]
        diff = s_row - s_col                                        # [Ntot, Ntot]
        d2 = diff * diff if d2 is None else d2 + diff * diff

    w = jnp.exp(-10.0 * d2)                                         # edge weights (EUP)

    # ---- same-graph mask (graphs are contiguous blocks of nodes_per_graph).
    # TODO(synk): for many graphs replace this static loop with an integer-div
    # based graph-id comparison or block-diagonal lane packing.
    same = None
    for g in range(num_graphs):
        lo = g * nodes_per_graph
        hi = lo + nodes_per_graph
        blk = (jj >= lo) & (jj < hi) & (ii >= lo) & (ii < hi)
        same = blk if same is None else (same | blk)
    d2m = jnp.where(same, d2, BIG)                                  # cross-graph = far

    # ---- k-NN via parallel rank-select (independent VPU compares; no serial
    # XLU reduce chain). rank[j,i] = #{j' : d2m[j',i] < d2m[j,i]
    #                                      or (d2m equal and j' < j)}.
    rank = jnp.zeros((ntot, ntot), jnp.float32)
    for jp in range(ntot):                                          # static unroll
        dj = d2m[jp:jp + 1, :]                                      # row j'  [1, Ntot]
        beats = (dj < d2m) | ((dj == d2m) & (jj > jp))
        rank = rank + jnp.where(beats, 1.0, 0.0)
    selected = rank < float(K)                                      # [Ntot, Ntot] bool

    wm = jnp.where(selected, w, 0.0)                                # mean mask
    neg_mask = jnp.where(selected, 0.0, -BIG)                       # additive max mask
    inv_k = jnp.float32(1.0 / K)

    # ---- lin_out1 (no bias), lane-dense over targets i.
    out = x_rows[0] * w_ref[OFF_WO1 + 0]
    for c in range(1, IN_CH):
        out = out + x_rows[c] * w_ref[OFF_WO1 + c]

    # ---- propagated features + aggregation, lin_out2 folded in (OUT_CH = 1).
    for p in range(PROP_DIM):
        h_col = x_cols[0] * w_ref[OFF_WH + 0 * PROP_DIM + p]        # h_j  [Ntot, 1]
        for c in range(1, IN_CH):
            h_col = h_col + x_cols[c] * w_ref[OFF_WH + c * PROP_DIM + p]
        h_col = h_col + w_ref[OFF_BH + p]
        mean_p = jnp.sum(wm * h_col, axis=0, keepdims=True) * inv_k         # [1, Ntot]
        max_p = jnp.max(w * h_col + neg_mask, axis=0, keepdims=True)        # [1, Ntot]
        out = out + mean_p * w_ref[OFF_WO2 + p] + max_p * w_ref[OFF_WO2 + PROP_DIM + p]

    out = out + w_ref[OFF_BO2]                                      # lin_out2 bias
    out_ref[...] = out                                              # [1, Ntot] lane-dense


def gravnet_forward(x, params):
    """x: [B, N, IN_CH] float32 -> [B, N, OUT_CH] float32."""
    B, N, C = x.shape
    assert C == IN_CH
    assert N >= K, "each graph needs at least k nodes"
    ws, bs, wh, bh, wo1, wo2, bo2 = params
    del bs  # lin_s bias cancels exactly in the pairwise difference

    # One flat SMEM parameter vector: a single tiny input DMA instead of seven.
    wflat = jnp.concatenate([
        ws.reshape(-1), wh.reshape(-1), bh.reshape(-1),
        wo1.reshape(-1), wo2.reshape(-1), bo2.reshape(-1),
    ]).astype(jnp.float32)
    assert wflat.shape == (N_PARAMS,)

    ntot = B * N
    x_flat = x.reshape(ntot, C).astype(jnp.float32)   # free, contiguous reshape

    kernel = functools.partial(gravnet_kernel, num_graphs=B, nodes_per_graph=N)

    # Single kernel invocation, no grid: at this size the kernel is overhead /
    # latency bound and splitting it only adds per-step pipeline overhead.
    # TODO(synk): for large B*N, tile the target axis in a grid (CORE_PARALLEL
    # on v7x) and set vmem_limit_bytes for the [Ntot, Ntot] temporaries.
    out_row = pl.pallas_call(
        kernel,
        out_shape=jax.ShapeDtypeStruct((1, ntot), jnp.float32),
        in_specs=[
            pl.BlockSpec(memory_space=pltpu.MemorySpace.VMEM),   # x_flat [Ntot, C]
            pl.BlockSpec(memory_space=pltpu.MemorySpace.SMEM),   # packed scalar params
        ],
        out_specs=pl.BlockSpec(memory_space=pltpu.MemorySpace.VMEM),
    )(x_flat, wflat)

    # [1, Ntot] is already in node order: reshaping to [B, N, 1] is free.
    return out_row.reshape(B, N, OUT_CH)


def init_params(key):
    ks = jax.random.split(key, 7)
    scale = 0.5
    ws = scale * jax.random.normal(ks[0], (IN_CH, SPACE_DIM), jnp.float32)       # lin_s weight
    bs = scale * jax.random.normal(ks[1], (1, SPACE_DIM), jnp.float32)           # lin_s bias
    wh = scale * jax.random.normal(ks[2], (IN_CH, PROP_DIM), jnp.float32)        # lin_h weight
    bh = scale * jax.random.normal(ks[3], (1, PROP_DIM), jnp.float32)            # lin_h bias
    wo1 = scale * jax.random.normal(ks[4], (IN_CH, OUT_CH), jnp.float32)         # lin_out1 (no bias)
    wo2 = scale * jax.random.normal(ks[5], (2 * PROP_DIM, OUT_CH), jnp.float32)  # lin_out2 weight
    bo2 = scale * jax.random.normal(ks[6], (1, OUT_CH), jnp.float32)             # lin_out2 bias
    return (ws, bs, wh, bh, wo1, wo2, bo2)


if __name__ == "__main__":
    key = jax.random.PRNGKey(0)
    k_x, k_p = jax.random.split(key)

    B, N = 2, 16                      # 2 graphs, 16 nodes each (N >= k = 10)
    x = jax.random.normal(k_x, (B, N, IN_CH), jnp.float32)
    params = init_params(k_p)

    fwd = jax.jit(gravnet_forward)
    out = fwd(x, params)
    out = jax.block_until_ready(out)

    assert out.shape == (B, N, OUT_CH)
    assert bool(jnp.all(jnp.isfinite(out)))
    print("KERNEL_OK")
</pallas_src>

<mosaic_0001>
module attributes {stable_mosaic.version = 11 : i64} {
  func.func @gravnet_kernel(%arg0: memref<32x3xf32, #tpu.memory_space<vmem>>, %arg1: memref<28xf32, #tpu.memory_space<smem>>, %arg2: memref<1x32xf32, #tpu.memory_space<vmem>>) attributes {dimension_semantics = [], scalar_prefetch = 0 : i64, scratch_operands = 0 : i64, tpu.core_type = #tpu.core_type<tc>} {
    %c0 = arith.constant 0 : index
    %c0_0 = arith.constant 0 : index
    %0 = vector.load %arg0[%c0, %c0_0] : memref<32x3xf32, #tpu.memory_space<vmem>>, vector<32x3xf32>
    %1 = tpu.iota {dimensions = array<i32: 0>} : vector<32x32xi32>
    %2 = tpu.iota {dimensions = array<i32: 1>} : vector<32x32xi32>
    %3 = arith.cmpi eq, %1, %2 : vector<32x32xi32>
    %cst = arith.constant 1.000000e+00 : f32
    %cst_1 = arith.constant 0.000000e+00 : f32
    %4 = vector.broadcast %cst : f32 to vector<32x32xf32>
    %5 = vector.broadcast %cst_1 : f32 to vector<32x32xf32>
    %6 = arith.select %3, %4, %5 : vector<32x32xi1>, vector<32x32xf32>
    %7 = vector.extract_strided_slice %0 {offsets = [0, 0], sizes = [32, 1], strides = [1, 1]} : vector<32x3xf32> to vector<32x1xf32>
    %8 = vector.extract_strided_slice %0 {offsets = [0, 1], sizes = [32, 1], strides = [1, 1]} : vector<32x3xf32> to vector<32x1xf32>
    %9 = vector.extract_strided_slice %0 {offsets = [0, 2], sizes = [32, 1], strides = [1, 1]} : vector<32x3xf32> to vector<32x1xf32>
    %10 = vector.broadcast %7 : vector<32x1xf32> to vector<32x32xf32>
    %11 = arith.mulf %10, %6 : vector<32x32xf32>
    %cst_2 = arith.constant dense<0.000000e+00> : vector<32xf32>
    %12 = vector.multi_reduction <add>, %11, %cst_2 [0] : vector<32x32xf32> to vector<32xf32>
    %13 = vector.shape_cast %12 : vector<32xf32> to vector<1x32xf32>
    %14 = vector.broadcast %8 : vector<32x1xf32> to vector<32x32xf32>
    %15 = arith.mulf %14, %6 : vector<32x32xf32>
    %cst_3 = arith.constant dense<0.000000e+00> : vector<32xf32>
    %16 = vector.multi_reduction <add>, %15, %cst_3 [0] : vector<32x32xf32> to vector<32xf32>
    %17 = vector.shape_cast %16 : vector<32xf32> to vector<1x32xf32>
    %18 = vector.broadcast %9 : vector<32x1xf32> to vector<32x32xf32>
    %19 = arith.mulf %18, %6 : vector<32x32xf32>
    %cst_4 = arith.constant dense<0.000000e+00> : vector<32xf32>
    %20 = vector.multi_reduction <add>, %19, %cst_4 [0] : vector<32x32xf32> to vector<32xf32>
    %21 = vector.shape_cast %20 : vector<32xf32> to vector<1x32xf32>
    %c0_5 = arith.constant 0 : index
    %22 = memref.load %arg1[%c0_5] : memref<28xf32, #tpu.memory_space<smem>>
    %23 = vector.broadcast %22 : f32 to vector<32x1xf32>
    %24 = arith.mulf %7, %23 : vector<32x1xf32>
    %c0_6 = arith.constant 0 : index
    %25 = memref.load %arg1[%c0_6] : memref<28xf32, #tpu.memory_space<smem>>
    %26 = vector.broadcast %25 : f32 to vector<1x32xf32>
    %27 = arith.mulf %13, %26 : vector<1x32xf32>
    %c2 = arith.constant 2 : index
    %28 = memref.load %arg1[%c2] : memref<28xf32, #tpu.memory_space<smem>>
    %29 = vector.broadcast %28 : f32 to vector<32x1xf32>
    %30 = arith.mulf %8, %29 : vector<32x1xf32>
    %31 = arith.addf %24, %30 : vector<32x1xf32>
    %c2_7 = arith.constant 2 : index
    %32 = memref.load %arg1[%c2_7] : memref<28xf32, #tpu.memory_space<smem>>
    %33 = vector.broadcast %32 : f32 to vector<1x32xf32>
    %34 = arith.mulf %17, %33 : vector<1x32xf32>
    %35 = arith.addf %27, %34 : vector<1x32xf32>
    %c4 = arith.constant 4 : index
    %36 = memref.load %arg1[%c4] : memref<28xf32, #tpu.memory_space<smem>>
    %37 = vector.broadcast %36 : f32 to vector<32x1xf32>
    %38 = arith.mulf %9, %37 : vector<32x1xf32>
    %39 = arith.addf %31, %38 : vector<32x1xf32>
    %c4_8 = arith.constant 4 : index
    %40 = memref.load %arg1[%c4_8] : memref<28xf32, #tpu.memory_space<smem>>
    %41 = vector.broadcast %40 : f32 to vector<1x32xf32>
    %42 = arith.mulf %21, %41 : vector<1x32xf32>
    %43 = arith.addf %35, %42 : vector<1x32xf32>
    %44 = vector.broadcast %43 : vector<1x32xf32> to vector<32x32xf32>
    %45 = vector.broadcast %39 : vector<32x1xf32> to vector<32x32xf32>
    %46 = arith.subf %44, %45 : vector<32x32xf32>
    %47 = arith.mulf %46, %46 : vector<32x32xf32>
    %c1 = arith.constant 1 : index
    %48 = memref.load %arg1[%c1] : memref<28xf32, #tpu.memory_space<smem>>
    %49 = vector.broadcast %48 : f32 to vector<32x1xf32>
    %50 = arith.mulf %7, %49 : vector<32x1xf32>
    %c1_9 = arith.constant 1 : index
    %51 = memref.load %arg1[%c1_9] : memref<28xf32, #tpu.memory_space<smem>>
    %52 = vector.broadcast %51 : f32 to vector<1x32xf32>
    %53 = arith.mulf %13, %52 : vector<1x32xf32>
    %c3 = arith.constant 3 : index
    %54 = memref.load %arg1[%c3] : memref<28xf32, #tpu.memory_space<smem>>
    %55 = vector.broadcast %54 : f32 to vector<32x1xf32>
    %56 = arith.mulf %8, %55 : vector<32x1xf32>
    %57 = arith.addf %50, %56 : vector<32x1xf32>
    %c3_10 = arith.constant 3 : index
    %58 = memref.load %arg1[%c3_10] : memref<28xf32, #tpu.memory_space<smem>>
    %59 = vector.broadcast %58 : f32 to vector<1x32xf32>
    %60 = arith.mulf %17, %59 : vector<1x32xf32>
    %61 = arith.addf %53, %60 : vector<1x32xf32>
    %c5 = arith.constant 5 : index
    %62 = memref.load %arg1[%c5] : memref<28xf32, #tpu.memory_space<smem>>
    %63 = vector.broadcast %62 : f32 to vector<32x1xf32>
    %64 = arith.mulf %9, %63 : vector<32x1xf32>
    %65 = arith.addf %57, %64 : vector<32x1xf32>
    %c5_11 = arith.constant 5 : index
    %66 = memref.load %arg1[%c5_11] : memref<28xf32, #tpu.memory_space<smem>>
    %67 = vector.broadcast %66 : f32 to vector<1x32xf32>
    %68 = arith.mulf %21, %67 : vector<1x32xf32>
    %69 = arith.addf %61, %68 : vector<1x32xf32>
    %70 = vector.broadcast %69 : vector<1x32xf32> to vector<32x32xf32>
    %71 = vector.broadcast %65 : vector<32x1xf32> to vector<32x32xf32>
    %72 = arith.subf %70, %71 : vector<32x32xf32>
    %73 = arith.mulf %72, %72 : vector<32x32xf32>
    %74 = arith.addf %47, %73 : vector<32x32xf32>
    %cst_12 = arith.constant -1.000000e+01 : f32
    %75 = vector.broadcast %cst_12 : f32 to vector<32x32xf32>
    %76 = arith.mulf %75, %74 : vector<32x32xf32>
    %77 = math.exp %76 : vector<32x32xf32>
    %c0_i32 = arith.constant 0 : i32
    %78 = vector.broadcast %c0_i32 : i32 to vector<32x32xi32>
    %79 = arith.cmpi sge, %1, %78 : vector<32x32xi32>
    %c16_i32 = arith.constant 16 : i32
    %80 = vector.broadcast %c16_i32 : i32 to vector<32x32xi32>
    %81 = arith.cmpi slt, %1, %80 : vector<32x32xi32>
    %82 = arith.andi %79, %81 : vector<32x32xi1>
    %c0_i32_13 = arith.constant 0 : i32
    %83 = vector.broadcast %c0_i32_13 : i32 to vector<32x32xi32>
    %84 = arith.cmpi sge, %2, %83 : vector<32x32xi32>
    %85 = arith.andi %82, %84 : vector<32x32xi1>
    %c16_i32_14 = arith.constant 16 : i32
    %86 = vector.broadcast %c16_i32_14 : i32 to vector<32x32xi32>
    %87 = arith.cmpi slt, %2, %86 : vector<32x32xi32>
    %88 = arith.andi %85, %87 : vector<32x32xi1>
    %c16_i32_15 = arith.constant 16 : i32
    %89 = vector.broadcast %c16_i32_15 : i32 to vector<32x32xi32>
    %90 = arith.cmpi sge, %1, %89 : vector<32x32xi32>
    %c32_i32 = arith.constant 32 : i32
    %91 = vector.broadcast %c32_i32 : i32 to vector<32x32xi32>
    %92 = arith.cmpi slt, %1, %91 : vector<32x32xi32>
    %93 = arith.andi %90, %92 : vector<32x32xi1>
    %c16_i32_16 = arith.constant 16 : i32
    %94 = vector.broadcast %c16_i32_16 : i32 to vector<32x32xi32>
    %95 = arith.cmpi sge, %2, %94 : vector<32x32xi32>
    %96 = arith.andi %93, %95 : vector<32x32xi1>
    %c32_i32_17 = arith.constant 32 : i32
    %97 = vector.broadcast %c32_i32_17 : i32 to vector<32x32xi32>
    %98 = arith.cmpi slt, %2, %97 : vector<32x32xi32>
    %99 = arith.andi %96, %98 : vector<32x32xi1>
    %100 = arith.ori %88, %99 : vector<32x32xi1>
    %cst_18 = arith.constant 1.000000e+30 : f32
    %101 = vector.broadcast %cst_18 : f32 to vector<32x32xf32>
    %102 = arith.select %100, %74, %101 : vector<32x32xi1>, vector<32x32xf32>
    %cst_19 = arith.constant 0.000000e+00 : f32
    %103 = vector.broadcast %cst_19 : f32 to vector<32x32xf32>
    %104 = vector.extract_strided_slice %102 {offsets = [0, 0], sizes = [1, 32], strides = [1, 1]} : vector<32x32xf32> to vector<1x32xf32>
    %105 = vector.broadcast %104 : vector<1x32xf32> to vector<32x32xf32>
    %106 = arith.cmpf olt, %105, %102 : vector<32x32xf32>
    %107 = vector.broadcast %104 : vector<1x32xf32> to vector<32x32xf32>
    %108 = arith.cmpf oeq, %107, %102 : vector<32x32xf32>
    %c0_i32_20 = arith.constant 0 : i32
    %109 = vector.broadcast %c0_i32_20 : i32 to vector<32x32xi32>
    %110 = arith.cmpi sgt, %1, %109 : vector<32x32xi32>
    %111 = arith.andi %108, %110 : vector<32x32xi1>
    %112 = arith.ori %106, %111 : vector<32x32xi1>
    %cst_21 = arith.constant 1.000000e+00 : f32
    %cst_22 = arith.constant 0.000000e+00 : f32
    %113 = vector.broadcast %cst_21 : f32 to vector<32x32xf32>
    %114 = vector.broadcast %cst_22 : f32 to vector<32x32xf32>
    %115 = arith.select %112, %113, %114 : vector<32x32xi1>, vector<32x32xf32>
    %116 = arith.addf %103, %115 : vector<32x32xf32>
    %117 = vector.extract_strided_slice %102 {offsets = [1, 0], sizes = [1, 32], strides = [1, 1]} : vector<32x32xf32> to vector<1x32xf32>
    %118 = vector.broadcast %117 : vector<1x32xf32> to vector<32x32xf32>
    %119 = arith.cmpf olt, %118, %102 : vector<32x32xf32>
    %120 = vector.broadcast %117 : vector<1x32xf32> to vector<32x32xf32>
    %121 = arith.cmpf oeq, %120, %102 : vector<32x32xf32>
    %c1_i32 = arith.constant 1 : i32
    %122 = vector.broadcast %c1_i32 : i32 to vector<32x32xi32>
    %123 = arith.cmpi sgt, %1, %122 : vector<32x32xi32>
    %124 = arith.andi %121, %123 : vector<32x32xi1>
    %125 = arith.ori %119, %124 : vector<32x32xi1>
    %cst_23 = arith.constant 1.000000e+00 : f32
    %cst_24 = arith.constant 0.000000e+00 : f32
    %126 = vector.broadcast %cst_23 : f32 to vector<32x32xf32>
    %127 = vector.broadcast %cst_24 : f32 to vector<32x32xf32>
    %128 = arith.select %125, %126, %127 : vector<32x32xi1>, vector<32x32xf32>
    %129 = arith.addf %116, %128 : vector<32x32xf32>
    %130 = vector.extract_strided_slice %102 {offsets = [2, 0], sizes = [1, 32], strides = [1, 1]} : vector<32x32xf32> to vector<1x32xf32>
    %131 = vector.broadcast %130 : vector<1x32xf32> to vector<32x32xf32>
    %132 = arith.cmpf olt, %131, %102 : vector<32x32xf32>
    %133 = vector.broadcast %130 : vector<1x32xf32> to vector<32x32xf32>
    %134 = arith.cmpf oeq, %133, %102 : vector<32x32xf32>
    %c2_i32 = arith.constant 2 : i32
    %135 = vector.broadcast %c2_i32 : i32 to vector<32x32xi32>
    %136 = arith.cmpi sgt, %1, %135 : vector<32x32xi32>
    %137 = arith.andi %134, %136 : vector<32x32xi1>
    %138 = arith.ori %132, %137 : vector<32x32xi1>
    %cst_25 = arith.constant 1.000000e+00 : f32
    %cst_26 = arith.constant 0.000000e+00 : f32
    %139 = vector.broadcast %cst_25 : f32 to vector<32x32xf32>
    %140 = vector.broadcast %cst_26 : f32 to vector<32x32xf32>
    %141 = arith.select %138, %139, %140 : vector<32x32xi1>, vector<32x32xf32>
    %142 = arith.addf %129, %141 : vector<32x32xf32>
    %143 = vector.extract_strided_slice %102 {offsets = [3, 0], sizes = [1, 32], strides = [1, 1]} : vector<32x32xf32> to vector<1x32xf32>
    %144 = vector.broadcast %143 : vector<1x32xf32> to vector<32x32xf32>
    %145 = arith.cmpf olt, %144, %102 : vector<32x32xf32>
    %146 = vector.broadcast %143 : vector<1x32xf32> to vector<32x32xf32>
    %147 = arith.cmpf oeq, %146, %102 : vector<32x32xf32>
    %c3_i32 = arith.constant 3 : i32
    %148 = vector.broadcast %c3_i32 : i32 to vector<32x32xi32>
    %149 = arith.cmpi sgt, %1, %148 : vector<32x32xi32>
    %150 = arith.andi %147, %149 : vector<32x32xi1>
    %151 = arith.ori %145, %150 : vector<32x32xi1>
    %cst_27 = arith.constant 1.000000e+00 : f32
    %cst_28 = arith.constant 0.000000e+00 : f32
    %152 = vector.broadcast %cst_27 : f32 to vector<32x32xf32>
    %153 = vector.broadcast %cst_28 : f32 to vector<32x32xf32>
    %154 = arith.select %151, %152, %153 : vector<32x32xi1>, vector<32x32xf32>
    %155 = arith.addf %142, %154 : vector<32x32xf32>
    %156 = vector.extract_strided_slice %102 {offsets = [4, 0], sizes = [1, 32], strides = [1, 1]} : vector<32x32xf32> to vector<1x32xf32>
    %157 = vector.broadcast %156 : vector<1x32xf32> to vector<32x32xf32>
    %158 = arith.cmpf olt, %157, %102 : vector<32x32xf32>
    %159 = vector.broadcast %156 : vector<1x32xf32> to vector<32x32xf32>
    %160 = arith.cmpf oeq, %159, %102 : vector<32x32xf32>
    %c4_i32 = arith.constant 4 : i32
    %161 = vector.broadcast %c4_i32 : i32 to vector<32x32xi32>
    %162 = arith.cmpi sgt, %1, %161 : vector<32x32xi32>
    %163 = arith.andi %160, %162 : vector<32x32xi1>
    %164 = arith.ori %158, %163 : vector<32x32xi1>
    %cst_29 = arith.constant 1.000000e+00 : f32
    %cst_30 = arith.constant 0.000000e+00 : f32
    %165 = vector.broadcast %cst_29 : f32 to vector<32x32xf32>
    %166 = vector.broadcast %cst_30 : f32 to vector<32x32xf32>
    %167 = arith.select %164, %165, %166 : vector<32x32xi1>, vector<32x32xf32>
    %168 = arith.addf %155, %167 : vector<32x32xf32>
    %169 = vector.extract_strided_slice %102 {offsets = [5, 0], sizes = [1, 32], strides = [1, 1]} : vector<32x32xf32> to vector<1x32xf32>
    %170 = vector.broadcast %169 : vector<1x32xf32> to vector<32x32xf32>
    %171 = arith.cmpf olt, %170, %102 : vector<32x32xf32>
    %172 = vector.broadcast %169 : vector<1x32xf32> to vector<32x32xf32>
    %173 = arith.cmpf oeq, %172, %102 : vector<32x32xf32>
    %c5_i32 = arith.constant 5 : i32
    %174 = vector.broadcast %c5_i32 : i32 to vector<32x32xi32>
    %175 = arith.cmpi sgt, %1, %174 : vector<32x32xi32>
    %176 = arith.andi %173, %175 : vector<32x32xi1>
    %177 = arith.ori %171, %176 : vector<32x32xi1>
    %cst_31 = arith.constant 1.000000e+00 : f32
    %cst_32 = arith.constant 0.000000e+00 : f32
    %178 = vector.broadcast %cst_31 : f32 to vector<32x32xf32>
    %179 = vector.broadcast %cst_32 : f32 to vector<32x32xf32>
    %180 = arith.select %177, %178, %179 : vector<32x32xi1>, vector<32x32xf32>
    %181 = arith.addf %168, %180 : vector<32x32xf32>
    %182 = vector.extract_strided_slice %102 {offsets = [6, 0], sizes = [1, 32], strides = [1, 1]} : vector<32x32xf32> to vector<1x32xf32>
    %183 = vector.broadcast %182 : vector<1x32xf32> to vector<32x32xf32>
    %184 = arith.cmpf olt, %183, %102 : vector<32x32xf32>
    %185 = vector.broadcast %182 : vector<1x32xf32> to vector<32x32xf32>
    %186 = arith.cmpf oeq, %185, %102 : vector<32x32xf32>
    %c6_i32 = arith.constant 6 : i32
    %187 = vector.broadcast %c6_i32 : i32 to vector<32x32xi32>
    %188 = arith.cmpi sgt, %1, %187 : vector<32x32xi32>
    %189 = arith.andi %186, %188 : vector<32x32xi1>
    %190 = arith.ori %184, %189 : vector<32x32xi1>
    %cst_33 = arith.constant 1.000000e+00 : f32
    %cst_34 = arith.constant 0.000000e+00 : f32
    %191 = vector.broadcast %cst_33 : f32 to vector<32x32xf32>
    %192 = vector.broadcast %cst_34 : f32 to vector<32x32xf32>
    %193 = arith.select %190, %191, %192 : vector<32x32xi1>, vector<32x32xf32>
    %194 = arith.addf %181, %193 : vector<32x32xf32>
    %195 = vector.extract_strided_slice %102 {offsets = [7, 0], sizes = [1, 32], strides = [1, 1]} : vector<32x32xf32> to vector<1x32xf32>
    %196 = vector.broadcast %195 : vector<1x32xf32> to vector<32x32xf32>
    %197 = arith.cmpf olt, %196, %102 : vector<32x32xf32>
    %198 = vector.broadcast %195 : vector<1x32xf32> to vector<32x32xf32>
    %199 = arith.cmpf oeq, %198, %102 : vector<32x32xf32>
    %c7_i32 = arith.constant 7 : i32
    %200 = vector.broadcast %c7_i32 : i32 to vector<32x32xi32>
    %201 = arith.cmpi sgt, %1, %200 : vector<32x32xi32>
    %202 = arith.andi %199, %201 : vector<32x32xi1>
    %203 = arith.ori %197, %202 : vector<32x32xi1>
    %cst_35 = arith.constant 1.000000e+00 : f32
    %cst_36 = arith.constant 0.000000e+00 : f32
    %204 = vector.broadcast %cst_35 : f32 to vector<32x32xf32>
    %205 = vector.broadcast %cst_36 : f32 to vector<32x32xf32>
    %206 = arith.select %203, %204, %205 : vector<32x32xi1>, vector<32x32xf32>
    %207 = arith.addf %194, %206 : vector<32x32xf32>
    %208 = vector.extract_strided_slice %102 {offsets = [8, 0], sizes = [1, 32], strides = [1, 1]} : vector<32x32xf32> to vector<1x32xf32>
    %209 = vector.broadcast %208 : vector<1x32xf32> to vector<32x32xf32>
    %210 = arith.cmpf olt, %209, %102 : vector<32x32xf32>
    %211 = vector.broadcast %208 : vector<1x32xf32> to vector<32x32xf32>
    %212 = arith.cmpf oeq, %211, %102 : vector<32x32xf32>
    %c8_i32 = arith.constant 8 : i32
    %213 = vector.broadcast %c8_i32 : i32 to vector<32x32xi32>
    %214 = arith.cmpi sgt, %1, %213 : vector<32x32xi32>
    %215 = arith.andi %212, %214 : vector<32x32xi1>
    %216 = arith.ori %210, %215 : vector<32x32xi1>
    %cst_37 = arith.constant 1.000000e+00 : f32
    %cst_38 = arith.constant 0.000000e+00 : f32
    %217 = vector.broadcast %cst_37 : f32 to vector<32x32xf32>
    %218 = vector.broadcast %cst_38 : f32 to vector<32x32xf32>
    %219 = arith.select %216, %217, %218 : vector<32x32xi1>, vector<32x32xf32>
    %220 = arith.addf %207, %219 : vector<32x32xf32>
    %221 = vector.extract_strided_slice %102 {offsets = [9, 0], sizes = [1, 32], strides = [1, 1]} : vector<32x32xf32> to vector<1x32xf32>
    %222 = vector.broadcast %221 : vector<1x32xf32> to vector<32x32xf32>
    %223 = arith.cmpf olt, %222, %102 : vector<32x32xf32>
    %224 = vector.broadcast %221 : vector<1x32xf32> to vector<32x32xf32>
    %225 = arith.cmpf oeq, %224, %102 : vector<32x32xf32>
    %c9_i32 = arith.constant 9 : i32
    %226 = vector.broadcast %c9_i32 : i32 to vector<32x32xi32>
    %227 = arith.cmpi sgt, %1, %226 : vector<32x32xi32>
    %228 = arith.andi %225, %227 : vector<32x32xi1>
    %229 = arith.ori %223, %228 : vector<32x32xi1>
    %cst_39 = arith.constant 1.000000e+00 : f32
    %cst_40 = arith.constant 0.000000e+00 : f32
    %230 = vector.broadcast %cst_39 : f32 to vector<32x32xf32>
    %231 = vector.broadcast %cst_40 : f32 to vector<32x32xf32>
    %232 = arith.select %229, %230, %231 : vector<32x32xi1>, vector<32x32xf32>
    %233 = arith.addf %220, %232 : vector<32x32xf32>
    %234 = vector.extract_strided_slice %102 {offsets = [10, 0], sizes = [1, 32], strides = [1, 1]} : vector<32x32xf32> to vector<1x32xf32>
    %235 = vector.broadcast %234 : vector<1x32xf32> to vector<32x32xf32>
    %236 = arith.cmpf olt, %235, %102 : vector<32x32xf32>
    %237 = vector.broadcast %234 : vector<1x32xf32> to vector<32x32xf32>
    %238 = arith.cmpf oeq, %237, %102 : vector<32x32xf32>
    %c10_i32 = arith.constant 10 : i32
    %239 = vector.broadcast %c10_i32 : i32 to vector<32x32xi32>
    %240 = arith.cmpi sgt, %1, %239 : vector<32x32xi32>
    %241 = arith.andi %238, %240 : vector<32x32xi1>
    %242 = arith.ori %236, %241 : vector<32x32xi1>
    %cst_41 = arith.constant 1.000000e+00 : f32
    %cst_42 = arith.constant 0.000000e+00 : f32
    %243 = vector.broadcast %cst_41 : f32 to vector<32x32xf32>
    %244 = vector.broadcast %cst_42 : f32 to vector<32x32xf32>
    %245 = arith.select %242, %243, %244 : vector<32x32xi1>, vector<32x32xf32>
    %246 = arith.addf %233, %245 : vector<32x32xf32>
    %247 = vector.extract_strided_slice %102 {offsets = [11, 0], sizes = [1, 32], strides = [1, 1]} : vector<32x32xf32> to vector<1x32xf32>
    %248 = vector.broadcast %247 : vector<1x32xf32> to vector<32x32xf32>
    %249 = arith.cmpf olt, %248, %102 : vector<32x32xf32>
    %250 = vector.broadcast %247 : vector<1x32xf32> to vector<32x32xf32>
    %251 = arith.cmpf oeq, %250, %102 : vector<32x32xf32>
    %c11_i32 = arith.constant 11 : i32
    %252 = vector.broadcast %c11_i32 : i32 to vector<32x32xi32>
    %253 = arith.cmpi sgt, %1, %252 : vector<32x32xi32>
    %254 = arith.andi %251, %253 : vector<32x32xi1>
    %255 = arith.ori %249, %254 : vector<32x32xi1>
    %cst_43 = arith.constant 1.000000e+00 : f32
    %cst_44 = arith.constant 0.000000e+00 : f32
    %256 = vector.broadcast %cst_43 : f32 to vector<32x32xf32>
    %257 = vector.broadcast %cst_44 : f32 to vector<32x32xf32>
    %258 = arith.select %255, %256, %257 : vector<32x32xi1>, vector<32x32xf32>
    %259 = arith.addf %246, %258 : vector<32x32xf32>
    %260 = vector.extract_strided_slice %102 {offsets = [12, 0], sizes = [1, 32], strides = [1, 1]} : vector<32x32xf32> to vector<1x32xf32>
    %261 = vector.broadcast %260 : vector<1x32xf32> to vector<32x32xf32>
    %262 = arith.cmpf olt, %261, %102 : vector<32x32xf32>
    %263 = vector.broadcast %260 : vector<1x32xf32> to vector<32x32xf32>
    %264 = arith.cmpf oeq, %263, %102 : vector<32x32xf32>
    %c12_i32 = arith.constant 12 : i32
    %265 = vector.broadcast %c12_i32 : i32 to vector<32x32xi32>
    %266 = arith.cmpi sgt, %1, %265 : vector<32x32xi32>
    %267 = arith.andi %264, %266 : vector<32x32xi1>
    %268 = arith.ori %262, %267 : vector<32x32xi1>
    %cst_45 = arith.constant 1.000000e+00 : f32
    %cst_46 = arith.constant 0.000000e+00 : f32
    %269 = vector.broadcast %cst_45 : f32 to vector<32x32xf32>
    %270 = vector.broadcast %cst_46 : f32 to vector<32x32xf32>
    %271 = arith.select %268, %269, %270 : vector<32x32xi1>, vector<32x32xf32>
    %272 = arith.addf %259, %271 : vector<32x32xf32>
    %273 = vector.extract_strided_slice %102 {offsets = [13, 0], sizes = [1, 32], strides = [1, 1]} : vector<32x32xf32> to vector<1x32xf32>
    %274 = vector.broadcast %273 : vector<1x32xf32> to vector<32x32xf32>
    %275 = arith.cmpf olt, %274, %102 : vector<32x32xf32>
    %276 = vector.broadcast %273 : vector<1x32xf32> to vector<32x32xf32>
    %277 = arith.cmpf oeq, %276, %102 : vector<32x32xf32>
    %c13_i32 = arith.constant 13 : i32
    %278 = vector.broadcast %c13_i32 : i32 to vector<32x32xi32>
    %279 = arith.cmpi sgt, %1, %278 : vector<32x32xi32>
    %280 = arith.andi %277, %279 : vector<32x32xi1>
    %281 = arith.ori %275, %280 : vector<32x32xi1>
    %cst_47 = arith.constant 1.000000e+00 : f32
    %cst_48 = arith.constant 0.000000e+00 : f32
    %282 = vector.broadcast %cst_47 : f32 to vector<32x32xf32>
    %283 = vector.broadcast %cst_48 : f32 to vector<32x32xf32>
    %284 = arith.select %281, %282, %283 : vector<32x32xi1>, vector<32x32xf32>
    %285 = arith.addf %272, %284 : vector<32x32xf32>
    %286 = vector.extract_strided_slice %102 {offsets = [14, 0], sizes = [1, 32], strides = [1, 1]} : vector<32x32xf32> to vector<1x32xf32>
    %287 = vector.broadcast %286 : vector<1x32xf32> to vector<32x32xf32>
    %288 = arith.cmpf olt, %287, %102 : vector<32x32xf32>
    %289 = vector.broadcast %286 : vector<1x32xf32> to vector<32x32xf32>
    %290 = arith.cmpf oeq, %289, %102 : vector<32x32xf32>
    %c14_i32 = arith.constant 14 : i32
    %291 = vector.broadcast %c14_i32 : i32 to vector<32x32xi32>
    %292 = arith.cmpi sgt, %1, %291 : vector<32x32xi32>
    %293 = arith.andi %290, %292 : vector<32x32xi1>
    %294 = arith.ori %288, %293 : vector<32x32xi1>
    %cst_49 = arith.constant 1.000000e+00 : f32
    %cst_50 = arith.constant 0.000000e+00 : f32
    %295 = vector.broadcast %cst_49 : f32 to vector<32x32xf32>
    %296 = vector.broadcast %cst_50 : f32 to vector<32x32xf32>
    %297 = arith.select %294, %295, %296 : vector<32x32xi1>, vector<32x32xf32>
    %298 = arith.addf %285, %297 : vector<32x32xf32>
    %299 = vector.extract_strided_slice %102 {offsets = [15, 0], sizes = [1, 32], strides = [1, 1]} : vector<32x32xf32> to vector<1x32xf32>
    %300 = vector.broadcast %299 : vector<1x32xf32> to vector<32x32xf32>
    %301 = arith.cmpf olt, %300, %102 : vector<32x32xf32>
    %302 = vector.broadcast %299 : vector<1x32xf32> to vector<32x32xf32>
    %303 = arith.cmpf oeq, %302, %102 : vector<32x32xf32>
    %c15_i32 = arith.constant 15 : i32
    %304 = vector.broadcast %c15_i32 : i32 to vector<32x32xi32>
    %305 = arith.cmpi sgt, %1, %304 : vector<32x32xi32>
    %306 = arith.andi %303, %305 : vector<32x32xi1>
    %307 = arith.ori %301, %306 : vector<32x32xi1>
    %cst_51 = arith.constant 1.000000e+00 : f32
    %cst_52 = arith.constant 0.000000e+00 : f32
    %308 = vector.broadcast %cst_51 : f32 to vector<32x32xf32>
    %309 = vector.broadcast %cst_52 : f32 to vector<32x32xf32>
    %310 = arith.select %307, %308, %309 : vector<32x32xi1>, vector<32x32xf32>
    %311 = arith.addf %298, %310 : vector<32x32xf32>
    %312 = vector.extract_strided_slice %102 {offsets = [16, 0], sizes = [1, 32], strides = [1, 1]} : vector<32x32xf32> to vector<1x32xf32>
    %313 = vector.broadcast %312 : vector<1x32xf32> to vector<32x32xf32>
    %314 = arith.cmpf olt, %313, %102 : vector<32x32xf32>
    %315 = vector.broadcast %312 : vector<1x32xf32> to vector<32x32xf32>
    %316 = arith.cmpf oeq, %315, %102 : vector<32x32xf32>
    %c16_i32_53 = arith.constant 16 : i32
    %317 = vector.broadcast %c16_i32_53 : i32 to vector<32x32xi32>
    %318 = arith.cmpi sgt, %1, %317 : vector<32x32xi32>
    %319 = arith.andi %316, %318 : vector<32x32xi1>
    %320 = arith.ori %314, %319 : vector<32x32xi1>
    %cst_54 = arith.constant 1.000000e+00 : f32
    %cst_55 = arith.constant 0.000000e+00 : f32
    %321 = vector.broadcast %cst_54 : f32 to vector<32x32xf32>
    %322 = vector.broadcast %cst_55 : f32 to vector<32x32xf32>
    %323 = arith.select %320, %321, %322 : vector<32x32xi1>, vector<32x32xf32>
    %324 = arith.addf %311, %323 : vector<32x32xf32>
    %325 = vector.extract_strided_slice %102 {offsets = [17, 0], sizes = [1, 32], strides = [1, 1]} : vector<32x32xf32> to vector<1x32xf32>
    %326 = vector.broadcast %325 : vector<1x32xf32> to vector<32x32xf32>
    %327 = arith.cmpf olt, %326, %102 : vector<32x32xf32>
    %328 = vector.broadcast %325 : vector<1x32xf32> to vector<32x32xf32>
    %329 = arith.cmpf oeq, %328, %102 : vector<32x32xf32>
    %c17_i32 = arith.constant 17 : i32
    %330 = vector.broadcast %c17_i32 : i32 to vector<32x32xi32>
    %331 = arith.cmpi sgt, %1, %330 : vector<32x32xi32>
    %332 = arith.andi %329, %331 : vector<32x32xi1>
    %333 = arith.ori %327, %332 : vector<32x32xi1>
    %cst_56 = arith.constant 1.000000e+00 : f32
    %cst_57 = arith.constant 0.000000e+00 : f32
    %334 = vector.broadcast %cst_56 : f32 to vector<32x32xf32>
    %335 = vector.broadcast %cst_57 : f32 to vector<32x32xf32>
    %336 = arith.select %333, %334, %335 : vector<32x32xi1>, vector<32x32xf32>
    %337 = arith.addf %324, %336 : vector<32x32xf32>
    %338 = vector.extract_strided_slice %102 {offsets = [18, 0], sizes = [1, 32], strides = [1, 1]} : vector<32x32xf32> to vector<1x32xf32>
    %339 = vector.broadcast %338 : vector<1x32xf32> to vector<32x32xf32>
    %340 = arith.cmpf olt, %339, %102 : vector<32x32xf32>
    %341 = vector.broadcast %338 : vector<1x32xf32> to vector<32x32xf32>
    %342 = arith.cmpf oeq, %341, %102 : vector<32x32xf32>
    %c18_i32 = arith.constant 18 : i32
    %343 = vector.broadcast %c18_i32 : i32 to vector<32x32xi32>
    %344 = arith.cmpi sgt, %1, %343 : vector<32x32xi32>
    %345 = arith.andi %342, %344 : vector<32x32xi1>
    %346 = arith.ori %340, %345 : vector<32x32xi1>
    %cst_58 = arith.constant 1.000000e+00 : f32
    %cst_59 = arith.constant 0.000000e+00 : f32
    %347 = vector.broadcast %cst_58 : f32 to vector<32x32xf32>
    %348 = vector.broadcast %cst_59 : f32 to vector<32x32xf32>
    %349 = arith.select %346, %347, %348 : vector<32x32xi1>, vector<32x32xf32>
    %350 = arith.addf %337, %349 : vector<32x32xf32>
    %351 = vector.extract_strided_slice %102 {offsets = [19, 0], sizes = [1, 32], strides = [1, 1]} : vector<32x32xf32> to vector<1x32xf32>
    %352 = vector.broadcast %351 : vector<1x32xf32> to vector<32x32xf32>
    %353 = arith.cmpf olt, %352, %102 : vector<32x32xf32>
    %354 = vector.broadcast %351 : vector<1x32xf32> to vector<32x32xf32>
    %355 = arith.cmpf oeq, %354, %102 : vector<32x32xf32>
    %c19_i32 = arith.constant 19 : i32
    %356 = vector.broadcast %c19_i32 : i32 to vector<32x32xi32>
    %357 = arith.cmpi sgt, %1, %356 : vector<32x32xi32>
    %358 = arith.andi %355, %357 : vector<32x32xi1>
    %359 = arith.ori %353, %358 : vector<32x32xi1>
    %cst_60 = arith.constant 1.000000e+00 : f32
    %cst_61 = arith.constant 0.000000e+00 : f32
    %360 = vector.broadcast %cst_60 : f32 to vector<32x32xf32>
    %361 = vector.broadcast %cst_61 : f32 to vector<32x32xf32>
    %362 = arith.select %359, %360, %361 : vector<32x32xi1>, vector<32x32xf32>
    %363 = arith.addf %350, %362 : vector<32x32xf32>
    %364 = vector.extract_strided_slice %102 {offsets = [20, 0], sizes = [1, 32], strides = [1, 1]} : vector<32x32xf32> to vector<1x32xf32>
    %365 = vector.broadcast %364 : vector<1x32xf32> to vector<32x32xf32>
    %366 = arith.cmpf olt, %365, %102 : vector<32x32xf32>
    %367 = vector.broadcast %364 : vector<1x32xf32> to vector<32x32xf32>
    %368 = arith.cmpf oeq, %367, %102 : vector<32x32xf32>
    %c20_i32 = arith.constant 20 : i32
    %369 = vector.broadcast %c20_i32 : i32 to vector<32x32xi32>
    %370 = arith.cmpi sgt, %1, %369 : vector<32x32xi32>
    %371 = arith.andi %368, %370 : vector<32x32xi1>
    %372 = arith.ori %366, %371 : vector<32x32xi1>
    %cst_62 = arith.constant 1.000000e+00 : f32
    %cst_63 = arith.constant 0.000000e+00 : f32
    %373 = vector.broadcast %cst_62 : f32 to vector<32x32xf32>
    %374 = vector.broadcast %cst_63 : f32 to vector<32x32xf32>
    %375 = arith.select %372, %373, %374 : vector<32x32xi1>, vector<32x32xf32>
    %376 = arith.addf %363, %375 : vector<32x32xf32>
    %377 = vector.extract_strided_slice %102 {offsets = [21, 0], sizes = [1, 32], strides = [1, 1]} : vector<32x32xf32> to vector<1x32xf32>
    %378 = vector.broadcast %377 : vector<1x32xf32> to vector<32x32xf32>
    %379 = arith.cmpf olt, %378, %102 : vector<32x32xf32>
    %380 = vector.broadcast %377 : vector<1x32xf32> to vector<32x32xf32>
    %381 = arith.cmpf oeq, %380, %102 : vector<32x32xf32>
    %c21_i32 = arith.constant 21 : i32
    %382 = vector.broadcast %c21_i32 : i32 to vector<32x32xi32>
    %383 = arith.cmpi sgt, %1, %382 : vector<32x32xi32>
    %384 = arith.andi %381, %383 : vector<32x32xi1>
    %385 = arith.ori %379, %384 : vector<32x32xi1>
    %cst_64 = arith.constant 1.000000e+00 : f32
    %cst_65 = arith.constant 0.000000e+00 : f32
    %386 = vector.broadcast %cst_64 : f32 to vector<32x32xf32>
    %387 = vector.broadcast %cst_65 : f32 to vector<32x32xf32>
    %388 = arith.select %385, %386, %387 : vector<32x32xi1>, vector<32x32xf32>
    %389 = arith.addf %376, %388 : vector<32x32xf32>
    %390 = vector.extract_strided_slice %102 {offsets = [22, 0], sizes = [1, 32], strides = [1, 1]} : vector<32x32xf32> to vector<1x32xf32>
    %391 = vector.broadcast %390 : vector<1x32xf32> to vector<32x32xf32>
    %392 = arith.cmpf olt, %391, %102 : vector<32x32xf32>
    %393 = vector.broadcast %390 : vector<1x32xf32> to vector<32x32xf32>
    %394 = arith.cmpf oeq, %393, %102 : vector<32x32xf32>
    %c22_i32 = arith.constant 22 : i32
    %395 = vector.broadcast %c22_i32 : i32 to vector<32x32xi32>
    %396 = arith.cmpi sgt, %1, %395 : vector<32x32xi32>
    %397 = arith.andi %394, %396 : vector<32x32xi1>
    %398 = arith.ori %392, %397 : vector<32x32xi1>
    %cst_66 = arith.constant 1.000000e+00 : f32
    %cst_67 = arith.constant 0.000000e+00 : f32
    %399 = vector.broadcast %cst_66 : f32 to vector<32x32xf32>
    %400 = vector.broadcast %cst_67 : f32 to vector<32x32xf32>
    %401 = arith.select %398, %399, %400 : vector<32x32xi1>, vector<32x32xf32>
    %402 = arith.addf %389, %401 : vector<32x32xf32>
    %403 = vector.extract_strided_slice %102 {offsets = [23, 0], sizes = [1, 32], strides = [1, 1]} : vector<32x32xf32> to vector<1x32xf32>
    %404 = vector.broadcast %403 : vector<1x32xf32> to vector<32x32xf32>
    %405 = arith.cmpf olt, %404, %102 : vector<32x32xf32>
    %406 = vector.broadcast %403 : vector<1x32xf32> to vector<32x32xf32>
    %407 = arith.cmpf oeq, %406, %102 : vector<32x32xf32>
    %c23_i32 = arith.constant 23 : i32
    %408 = vector.broadcast %c23_i32 : i32 to vector<32x32xi32>
    %409 = arith.cmpi sgt, %1, %408 : vector<32x32xi32>
    %410 = arith.andi %407, %409 : vector<32x32xi1>
    %411 = arith.ori %405, %410 : vector<32x32xi1>
    %cst_68 = arith.constant 1.000000e+00 : f32
    %cst_69 = arith.constant 0.000000e+00 : f32
    %412 = vector.broadcast %cst_68 : f32 to vector<32x32xf32>
    %413 = vector.broadcast %cst_69 : f32 to vector<32x32xf32>
    %414 = arith.select %411, %412, %413 : vector<32x32xi1>, vector<32x32xf32>
    %415 = arith.addf %402, %414 : vector<32x32xf32>
    %416 = vector.extract_strided_slice %102 {offsets = [24, 0], sizes = [1, 32], strides = [1, 1]} : vector<32x32xf32> to vector<1x32xf32>
    %417 = vector.broadcast %416 : vector<1x32xf32> to vector<32x32xf32>
    %418 = arith.cmpf olt, %417, %102 : vector<32x32xf32>
    %419 = vector.broadcast %416 : vector<1x32xf32> to vector<32x32xf32>
    %420 = arith.cmpf oeq, %419, %102 : vector<32x32xf32>
    %c24_i32 = arith.constant 24 : i32
    %421 = vector.broadcast %c24_i32 : i32 to vector<32x32xi32>
    %422 = arith.cmpi sgt, %1, %421 : vector<32x32xi32>
    %423 = arith.andi %420, %422 : vector<32x32xi1>
    %424 = arith.ori %418, %423 : vector<32x32xi1>
    %cst_70 = arith.constant 1.000000e+00 : f32
    %cst_71 = arith.constant 0.000000e+00 : f32
    %425 = vector.broadcast %cst_70 : f32 to vector<32x32xf32>
    %426 = vector.broadcast %cst_71 : f32 to vector<32x32xf32>
    %427 = arith.select %424, %425, %426 : vector<32x32xi1>, vector<32x32xf32>
    %428 = arith.addf %415, %427 : vector<32x32xf32>
    %429 = vector.extract_strided_slice %102 {offsets = [25, 0], sizes = [1, 32], strides = [1, 1]} : vector<32x32xf32> to vector<1x32xf32>
    %430 = vector.broadcast %429 : vector<1x32xf32> to vector<32x32xf32>
    %431 = arith.cmpf olt, %430, %102 : vector<32x32xf32>
    %432 = vector.broadcast %429 : vector<1x32xf32> to vector<32x32xf32>
    %433 = arith.cmpf oeq, %432, %102 : vector<32x32xf32>
    %c25_i32 = arith.constant 25 : i32
    %434 = vector.broadcast %c25_i32 : i32 to vector<32x32xi32>
    %435 = arith.cmpi sgt, %1, %434 : vector<32x32xi32>
    %436 = arith.andi %433, %435 : vector<32x32xi1>
    %437 = arith.ori %431, %436 : vector<32x32xi1>
    %cst_72 = arith.constant 1.000000e+00 : f32
    %cst_73 = arith.constant 0.000000e+00 : f32
    %438 = vector.broadcast %cst_72 : f32 to vector<32x32xf32>
    %439 = vector.broadcast %cst_73 : f32 to vector<32x32xf32>
    %440 = arith.select %437, %438, %439 : vector<32x32xi1>, vector<32x32xf32>
    %441 = arith.addf %428, %440 : vector<32x32xf32>
    %442 = vector.extract_strided_slice %102 {offsets = [26, 0], sizes = [1, 32], strides = [1, 1]} : vector<32x32xf32> to vector<1x32xf32>
    %443 = vector.broadcast %442 : vector<1x32xf32> to vector<32x32xf32>
    %444 = arith.cmpf olt, %443, %102 : vector<32x32xf32>
    %445 = vector.broadcast %442 : vector<1x32xf32> to vector<32x32xf32>
    %446 = arith.cmpf oeq, %445, %102 : vector<32x32xf32>
    %c26_i32 = arith.constant 26 : i32
    %447 = vector.broadcast %c26_i32 : i32 to vector<32x32xi32>
    %448 = arith.cmpi sgt, %1, %447 : vector<32x32xi32>
    %449 = arith.andi %446, %448 : vector<32x32xi1>
    %450 = arith.ori %444, %449 : vector<32x32xi1>
    %cst_74 = arith.constant 1.000000e+00 : f32
    %cst_75 = arith.constant 0.000000e+00 : f32
    %451 = vector.broadcast %cst_74 : f32 to vector<32x32xf32>
    %452 = vector.broadcast %cst_75 : f32 to vector<32x32xf32>
    %453 = arith.select %450, %451, %452 : vector<32x32xi1>, vector<32x32xf32>
    %454 = arith.addf %441, %453 : vector<32x32xf32>
    %455 = vector.extract_strided_slice %102 {offsets = [27, 0], sizes = [1, 32], strides = [1, 1]} : vector<32x32xf32> to vector<1x32xf32>
    %456 = vector.broadcast %455 : vector<1x32xf32> to vector<32x32xf32>
    %457 = arith.cmpf olt, %456, %102 : vector<32x32xf32>
    %458 = vector.broadcast %455 : vector<1x32xf32> to vector<32x32xf32>
    %459 = arith.cmpf oeq, %458, %102 : vector<32x32xf32>
    %c27_i32 = arith.constant 27 : i32
    %460 = vector.broadcast %c27_i32 : i32 to vector<32x32xi32>
    %461 = arith.cmpi sgt, %1, %460 : vector<32x32xi32>
    %462 = arith.andi %459, %461 : vector<32x32xi1>
    %463 = arith.ori %457, %462 : vector<32x32xi1>
    %cst_76 = arith.constant 1.000000e+00 : f32
    %cst_77 = arith.constant 0.000000e+00 : f32
    %464 = vector.broadcast %cst_76 : f32 to vector<32x32xf32>
    %465 = vector.broadcast %cst_77 : f32 to vector<32x32xf32>
    %466 = arith.select %463, %464, %465 : vector<32x32xi1>, vector<32x32xf32>
    %467 = arith.addf %454, %466 : vector<32x32xf32>
    %468 = vector.extract_strided_slice %102 {offsets = [28, 0], sizes = [1, 32], strides = [1, 1]} : vector<32x32xf32> to vector<1x32xf32>
    %469 = vector.broadcast %468 : vector<1x32xf32> to vector<32x32xf32>
    %470 = arith.cmpf olt, %469, %102 : vector<32x32xf32>
    %471 = vector.broadcast %468 : vector<1x32xf32> to vector<32x32xf32>
    %472 = arith.cmpf oeq, %471, %102 : vector<32x32xf32>
    %c28_i32 = arith.constant 28 : i32
    %473 = vector.broadcast %c28_i32 : i32 to vector<32x32xi32>
    %474 = arith.cmpi sgt, %1, %473 : vector<32x32xi32>
    %475 = arith.andi %472, %474 : vector<32x32xi1>
    %476 = arith.ori %470, %475 : vector<32x32xi1>
    %cst_78 = arith.constant 1.000000e+00 : f32
    %cst_79 = arith.constant 0.000000e+00 : f32
    %477 = vector.broadcast %cst_78 : f32 to vector<32x32xf32>
    %478 = vector.broadcast %cst_79 : f32 to vector<32x32xf32>
    %479 = arith.select %476, %477, %478 : vector<32x32xi1>, vector<32x32xf32>
    %480 = arith.addf %467, %479 : vector<32x32xf32>
    %481 = vector.extract_strided_slice %102 {offsets = [29, 0], sizes = [1, 32], strides = [1, 1]} : vector<32x32xf32> to vector<1x32xf32>
    %482 = vector.broadcast %481 : vector<1x32xf32> to vector<32x32xf32>
    %483 = arith.cmpf olt, %482, %102 : vector<32x32xf32>
    %484 = vector.broadcast %481 : vector<1x32xf32> to vector<32x32xf32>
    %485 = arith.cmpf oeq, %484, %102 : vector<32x32xf32>
    %c29_i32 = arith.constant 29 : i32
    %486 = vector.broadcast %c29_i32 : i32 to vector<32x32xi32>
    %487 = arith.cmpi sgt, %1, %486 : vector<32x32xi32>
    %488 = arith.andi %485, %487 : vector<32x32xi1>
    %489 = arith.ori %483, %488 : vector<32x32xi1>
    %cst_80 = arith.constant 1.000000e+00 : f32
    %cst_81 = arith.constant 0.000000e+00 : f32
    %490 = vector.broadcast %cst_80 : f32 to vector<32x32xf32>
    %491 = vector.broadcast %cst_81 : f32 to vector<32x32xf32>
    %492 = arith.select %489, %490, %491 : vector<32x32xi1>, vector<32x32xf32>
    %493 = arith.addf %480, %492 : vector<32x32xf32>
    %494 = vector.extract_strided_slice %102 {offsets = [30, 0], sizes = [1, 32], strides = [1, 1]} : vector<32x32xf32> to vector<1x32xf32>
    %495 = vector.broadcast %494 : vector<1x32xf32> to vector<32x32xf32>
    %496 = arith.cmpf olt, %495, %102 : vector<32x32xf32>
    %497 = vector.broadcast %494 : vector<1x32xf32> to vector<32x32xf32>
    %498 = arith.cmpf oeq, %497, %102 : vector<32x32xf32>
    %c30_i32 = arith.constant 30 : i32
    %499 = vector.broadcast %c30_i32 : i32 to vector<32x32xi32>
    %500 = arith.cmpi sgt, %1, %499 : vector<32x32xi32>
    %501 = arith.andi %498, %500 : vector<32x32xi1>
    %502 = arith.ori %496, %501 : vector<32x32xi1>
    %cst_82 = arith.constant 1.000000e+00 : f32
    %cst_83 = arith.constant 0.000000e+00 : f32
    %503 = vector.broadcast %cst_82 : f32 to vector<32x32xf32>
    %504 = vector.broadcast %cst_83 : f32 to vector<32x32xf32>
    %505 = arith.select %502, %503, %504 : vector<32x32xi1>, vector<32x32xf32>
    %506 = arith.addf %493, %505 : vector<32x32xf32>
    %507 = vector.extract_strided_slice %102 {offsets = [31, 0], sizes = [1, 32], strides = [1, 1]} : vector<32x32xf32> to vector<1x32xf32>
    %508 = vector.broadcast %507 : vector<1x32xf32> to vector<32x32xf32>
    %509 = arith.cmpf olt, %508, %102 : vector<32x32xf32>
    %510 = vector.broadcast %507 : vector<1x32xf32> to vector<32x32xf32>
    %511 = arith.cmpf oeq, %510, %102 : vector<32x32xf32>
    %c31_i32 = arith.constant 31 : i32
    %512 = vector.broadcast %c31_i32 : i32 to vector<32x32xi32>
    %513 = arith.cmpi sgt, %1, %512 : vector<32x32xi32>
    %514 = arith.andi %511, %513 : vector<32x32xi1>
    %515 = arith.ori %509, %514 : vector<32x32xi1>
    %cst_84 = arith.constant 1.000000e+00 : f32
    %cst_85 = arith.constant 0.000000e+00 : f32
    %516 = vector.broadcast %cst_84 : f32 to vector<32x32xf32>
    %517 = vector.broadcast %cst_85 : f32 to vector<32x32xf32>
    %518 = arith.select %515, %516, %517 : vector<32x32xi1>, vector<32x32xf32>
    %519 = arith.addf %506, %518 : vector<32x32xf32>
    %cst_86 = arith.constant 1.000000e+01 : f32
    %520 = vector.broadcast %cst_86 : f32 to vector<32x32xf32>
    %521 = arith.cmpf olt, %519, %520 : vector<32x32xf32>
    %cst_87 = arith.constant 0.000000e+00 : f32
    %522 = vector.broadcast %cst_87 : f32 to vector<32x32xf32>
    %523 = arith.select %521, %77, %522 : vector<32x32xi1>, vector<32x32xf32>
    %cst_88 = arith.constant 0.000000e+00 : f32
    %cst_89 = arith.constant -1.000000e+30 : f32
    %524 = vector.broadcast %cst_88 : f32 to vector<32x32xf32>
    %525 = vector.broadcast %cst_89 : f32 to vector<32x32xf32>
    %526 = arith.select %521, %524, %525 : vector<32x32xi1>, vector<32x32xf32>
    %c18 = arith.constant 18 : index
    %527 = memref.load %arg1[%c18] : memref<28xf32, #tpu.memory_space<smem>>
    %528 = vector.broadcast %527 : f32 to vector<1x32xf32>
    %529 = arith.mulf %13, %528 : vector<1x32xf32>
    %c19 = arith.constant 19 : index
    %530 = memref.load %arg1[%c19] : memref<28xf32, #tpu.memory_space<smem>>
    %531 = vector.broadcast %530 : f32 to vector<1x32xf32>
    %532 = arith.mulf %17, %531 : vector<1x32xf32>
    %533 = arith.addf %529, %532 : vector<1x32xf32>
    %c20 = arith.constant 20 : index
    %534 = memref.load %arg1[%c20] : memref<28xf32, #tpu.memory_space<smem>>
    %535 = vector.broadcast %534 : f32 to vector<1x32xf32>
    %536 = arith.mulf %21, %535 : vector<1x32xf32>
    %537 = arith.addf %533, %536 : vector<1x32xf32>
    %c6 = arith.constant 6 : index
    %538 = memref.load %arg1[%c6] : memref<28xf32, #tpu.memory_space<smem>>
    %539 = vector.broadcast %538 : f32 to vector<32x1xf32>
    %540 = arith.mulf %7, %539 : vector<32x1xf32>
    %c9 = arith.constant 9 : index
    %541 = memref.load %arg1[%c9] : memref<28xf32, #tpu.memory_space<smem>>
    %542 = vector.broadcast %541 : f32 to vector<32x1xf32>
    %543 = arith.mulf %8, %542 : vector<32x1xf32>
    %544 = arith.addf %540, %543 : vector<32x1xf32>
    %c12 = arith.constant 12 : index
    %545 = memref.load %arg1[%c12] : memref<28xf32, #tpu.memory_space<smem>>
    %546 = vector.broadcast %545 : f32 to vector<32x1xf32>
    %547 = arith.mulf %9, %546 : vector<32x1xf32>
    %548 = arith.addf %544, %547 : vector<32x1xf32>
    %c15 = arith.constant 15 : index
    %549 = memref.load %arg1[%c15] : memref<28xf32, #tpu.memory_space<smem>>
    %550 = vector.broadcast %549 : f32 to vector<32x1xf32>
    %551 = arith.addf %548, %550 : vector<32x1xf32>
    %552 = vector.broadcast %551 : vector<32x1xf32> to vector<32x32xf32>
    %553 = arith.mulf %523, %552 : vector<32x32xf32>
    %cst_90 = arith.constant dense<0.000000e+00> : vector<32xf32>
    %554 = vector.multi_reduction <add>, %553, %cst_90 [0] : vector<32x32xf32> to vector<32xf32>
    %555 = vector.shape_cast %554 : vector<32xf32> to vector<1x32xf32>
    %cst_91 = arith.constant 1.000000e-01 : f32
    %556 = vector.broadcast %cst_91 : f32 to vector<1x32xf32>
    %557 = arith.mulf %555, %556 : vector<1x32xf32>
    %558 = vector.broadcast %551 : vector<32x1xf32> to vector<32x32xf32>
    %559 = arith.mulf %77, %558 : vector<32x32xf32>
    %560 = arith.addf %559, %526 : vector<32x32xf32>
    %cst_92 = arith.constant dense<0xFF800000> : vector<32xf32>
    %561 = vector.multi_reduction <maximumf>, %560, %cst_92 [0] : vector<32x32xf32> to vector<32xf32>
    %562 = vector.shape_cast %561 : vector<32xf32> to vector<1x32xf32>
    %c21 = arith.constant 21 : index
    %563 = memref.load %arg1[%c21] : memref<28xf32, #tpu.memory_space<smem>>
    %564 = vector.broadcast %563 : f32 to vector<1x32xf32>
    %565 = arith.mulf %557, %564 : vector<1x32xf32>
    %566 = arith.addf %537, %565 : vector<1x32xf32>
    %c24 = arith.constant 24 : index
    %567 = memref.load %arg1[%c24] : memref<28xf32, #tpu.memory_space<smem>>
    %568 = vector.broadcast %567 : f32 to vector<1x32xf32>
    %569 = arith.mulf %562, %568 : vector<1x32xf32>
    %570 = arith.addf %566, %569 : vector<1x32xf32>
    %c7 = arith.constant 7 : index
    %571 = memref.load %arg1[%c7] : memref<28xf32, #tpu.memory_space<smem>>
    %572 = vector.broadcast %571 : f32 to vector<32x1xf32>
    %573 = arith.mulf %7, %572 : vector<32x1xf32>
    %c10 = arith.constant 10 : index
    %574 = memref.load %arg1[%c10] : memref<28xf32, #tpu.memory_space<smem>>
    %575 = vector.broadcast %574 : f32 to vector<32x1xf32>
    %576 = arith.mulf %8, %575 : vector<32x1xf32>
    %577 = arith.addf %573, %576 : vector<32x1xf32>
    %c13 = arith.constant 13 : index
    %578 = memref.load %arg1[%c13] : memref<28xf32, #tpu.memory_space<smem>>
    %579 = vector.broadcast %578 : f32 to vector<32x1xf32>
    %580 = arith.mulf %9, %579 : vector<32x1xf32>
    %581 = arith.addf %577, %580 : vector<32x1xf32>
    %c16 = arith.constant 16 : index
    %582 = memref.load %arg1[%c16] : memref<28xf32, #tpu.memory_space<smem>>
    %583 = vector.broadcast %582 : f32 to vector<32x1xf32>
    %584 = arith.addf %581, %583 : vector<32x1xf32>
    %585 = vector.broadcast %584 : vector<32x1xf32> to vector<32x32xf32>
    %586 = arith.mulf %523, %585 : vector<32x32xf32>
    %cst_93 = arith.constant dense<0.000000e+00> : vector<32xf32>
    %587 = vector.multi_reduction <add>, %586, %cst_93 [0] : vector<32x32xf32> to vector<32xf32>
    %588 = vector.shape_cast %587 : vector<32xf32> to vector<1x32xf32>
    %cst_94 = arith.constant 1.000000e-01 : f32
    %589 = vector.broadcast %cst_94 : f32 to vector<1x32xf32>
    %590 = arith.mulf %588, %589 : vector<1x32xf32>
    %591 = vector.broadcast %584 : vector<32x1xf32> to vector<32x32xf32>
    %592 = arith.mulf %77, %591 : vector<32x32xf32>
    %593 = arith.addf %592, %526 : vector<32x32xf32>
    %cst_95 = arith.constant dense<0xFF800000> : vector<32xf32>
    %594 = vector.multi_reduction <maximumf>, %593, %cst_95 [0] : vector<32x32xf32> to vector<32xf32>
    %595 = vector.shape_cast %594 : vector<32xf32> to vector<1x32xf32>
    %c22 = arith.constant 22 : index
    %596 = memref.load %arg1[%c22] : memref<28xf32, #tpu.memory_space<smem>>
    %597 = vector.broadcast %596 : f32 to vector<1x32xf32>
    %598 = arith.mulf %590, %597 : vector<1x32xf32>
    %599 = arith.addf %570, %598 : vector<1x32xf32>
    %c25 = arith.constant 25 : index
    %600 = memref.load %arg1[%c25] : memref<28xf32, #tpu.memory_space<smem>>
    %601 = vector.broadcast %600 : f32 to vector<1x32xf32>
    %602 = arith.mulf %595, %601 : vector<1x32xf32>
    %603 = arith.addf %599, %602 : vector<1x32xf32>
    %c8 = arith.constant 8 : index
    %604 = memref.load %arg1[%c8] : memref<28xf32, #tpu.memory_space<smem>>
    %605 = vector.broadcast %604 : f32 to vector<32x1xf32>
    %606 = arith.mulf %7, %605 : vector<32x1xf32>
    %c11 = arith.constant 11 : index
    %607 = memref.load %arg1[%c11] : memref<28xf32, #tpu.memory_space<smem>>
    %608 = vector.broadcast %607 : f32 to vector<32x1xf32>
    %609 = arith.mulf %8, %608 : vector<32x1xf32>
    %610 = arith.addf %606, %609 : vector<32x1xf32>
    %c14 = arith.constant 14 : index
    %611 = memref.load %arg1[%c14] : memref<28xf32, #tpu.memory_space<smem>>
    %612 = vector.broadcast %611 : f32 to vector<32x1xf32>
    %613 = arith.mulf %9, %612 : vector<32x1xf32>
    %614 = arith.addf %610, %613 : vector<32x1xf32>
    %c17 = arith.constant 17 : index
    %615 = memref.load %arg1[%c17] : memref<28xf32, #tpu.memory_space<smem>>
    %616 = vector.broadcast %615 : f32 to vector<32x1xf32>
    %617 = arith.addf %614, %616 : vector<32x1xf32>
    %618 = vector.broadcast %617 : vector<32x1xf32> to vector<32x32xf32>
    %619 = arith.mulf %523, %618 : vector<32x32xf32>
    %cst_96 = arith.constant dense<0.000000e+00> : vector<32xf32>
    %620 = vector.multi_reduction <add>, %619, %cst_96 [0] : vector<32x32xf32> to vector<32xf32>
    %621 = vector.shape_cast %620 : vector<32xf32> to vector<1x32xf32>
    %cst_97 = arith.constant 1.000000e-01 : f32
    %622 = vector.broadcast %cst_97 : f32 to vector<1x32xf32>
    %623 = arith.mulf %621, %622 : vector<1x32xf32>
    %624 = vector.broadcast %617 : vector<32x1xf32> to vector<32x32xf32>
    %625 = arith.mulf %77, %624 : vector<32x32xf32>
    %626 = arith.addf %625, %526 : vector<32x32xf32>
    %cst_98 = arith.constant dense<0xFF800000> : vector<32xf32>
    %627 = vector.multi_reduction <maximumf>, %626, %cst_98 [0] : vector<32x32xf32> to vector<32xf32>
    %628 = vector.shape_cast %627 : vector<32xf32> to vector<1x32xf32>
    %c23 = arith.constant 23 : index
    %629 = memref.load %arg1[%c23] : memref<28xf32, #tpu.memory_space<smem>>
    %630 = vector.broadcast %629 : f32 to vector<1x32xf32>
    %631 = arith.mulf %623, %630 : vector<1x32xf32>
    %632 = arith.addf %603, %631 : vector<1x32xf32>
    %c26 = arith.constant 26 : index
    %633 = memref.load %arg1[%c26] : memref<28xf32, #tpu.memory_space<smem>>
    %634 = vector.broadcast %633 : f32 to vector<1x32xf32>
    %635 = arith.mulf %628, %634 : vector<1x32xf32>
    %636 = arith.addf %632, %635 : vector<1x32xf32>
    %c27 = arith.constant 27 : index
    %637 = memref.load %arg1[%c27] : memref<28xf32, #tpu.memory_space<smem>>
    %638 = vector.broadcast %637 : f32 to vector<1x32xf32>
    %639 = arith.addf %636, %638 : vector<1x32xf32>
    %c0_99 = arith.constant 0 : index
    %c0_100 = arith.constant 0 : index
    %640 = vector.load %arg2[%c0_99, %c0_100] : memref<1x32xf32, #tpu.memory_space<vmem>>, vector<1x32xf32>
    tpu.vector_store %arg2[%c0_99, %c0_100], %639 {strides = array<i32>} : memref<1x32xf32, #tpu.memory_space<vmem>>, vector<1x32xf32>,
    return
  }
}

</mosaic_0001>

<llo_original>
// kernel: gravnet_forward.1
$region0: #{gravnet_forward.1}
  #allocation0 [shape = 'u32[]', space=smem, size = 0x4, offset = 0x4, fixed_abs, tag = 'smem constant byte address 0x4 - core index']
  #allocation1 [shape = 'u32[144,128]{1,0:T(1,128)}', space=vmem, size = 0x12000, scoped, tag = 'internal scratch']
  %s0 = inlined_call_operand.vmem [shape: f32[32,3], index: 0, kind: input, shape index: {}]
  %s1 = inlined_call_operand.vmem [shape: f32[28], index: 1, kind: input, shape index: {}]
  %s2 = inlined_call_operand.vmem [shape: f32[1,32], index: 2, kind: output, shape index: {}]
  %s3 = sld [smem:[#allocation0]]
  $region22: #{gravnet_forward.1} parent=0
    _
  %s5 = ssub.s32 1, %s3
  %s6 = scalar_select 0, %s5, %s3
  $region1: #{gravnet_forward.1} parent=0
    #allocation2 [shape = 'u8[512]{0}', space=smem, size = 0x200, scoped, tag = 'input window, operand 1, single buffered']
    #allocation3 [shape = 's32[1]{0}', space=sflag, size = 0x4, scoped, tag = 'scoped memory for gravnet_forward.1']
    %7 = vsyncpa [#allocation3], 0
    // Predicated region
    $region2: #{gravnet_forward.1} parent=1 // pred_check
      _
    $region3: #{gravnet_forward.1} parent=1 // pred_check_branch
      %9 = sbr.rel (0) target = $region5
    $region4: #{gravnet_forward.1} parent=1 // pred_region
      _
    $region5: #{gravnet_forward.1} parent=1 // pred_fallthru
      _
    // Predicated region
    $region6: #{gravnet_forward.1} parent=1 // pred_check
      _
    $region7: #{gravnet_forward.1} parent=1 // pred_check_branch
      %11 = sbr.rel (0) target = $region9
    $region8: #{gravnet_forward.1} parent=1 // pred_region
      %s13 = ssub.s32 16, 16
      %14 = vsyncadd [#allocation3], %s13
      %s16 = sshll.u32 %s1, 4
      %s17 = int_to_ptr.vmem [resolvable:$true] %s16
      %19 = dma.vmem_to_smem %s17, 16, [#allocation2], [#allocation3]
    $region9: #{gravnet_forward.1} parent=1 // pred_fallthru
      _
    // Predicated region
    $region10: #{gravnet_forward.1} parent=1 // pred_check
      _
    $region11: #{gravnet_forward.1} parent=1 // pred_check_branch
      %21 = sbr.rel (0) target = $region13
    $region12: #{gravnet_forward.1} parent=1 // pred_region
      %22 = dma.done [#allocation3], 16
    $region13: #{gravnet_forward.1} parent=1 // pred_fallthru
      _
    %23 = sfence
    %v24 = vld [vmem:[%s0] sm:$0xff]
    %v25 = vld [vmem:[%s0 + $0x8] sm:$0xff]
    %v26 = vld [vmem:[%s0 + $0x10] sm:$0xff]
    %v27 = vld [vmem:[%s0 + $0x18] sm:$0xff]
    %v28 = vlaneseq
    %v29 = vshrl.u32 %v28, 7
    %v30 = vadd.s32 %v29, 8
    %v31 = vadd.s32 %v29, 16
    %v32 = vadd.s32 %v29, 24
    %v33 = vlaneseq
    %v34 = vand.u32 %v33, 127
    %vm35 = vcmp.eq.s32.totalorder %v29, %v34
    %vm36 = vcmp.eq.s32.totalorder %v30, %v34
    %vm37 = vcmp.eq.s32.totalorder %v31, %v34
    %vm38 = vcmp.eq.s32.totalorder %v32, %v34
    %v39 = vsel %vm35, 1.0, 0.0
    %v40 = vsel %vm36, 1.0, 0.0
    %v41 = vsel %vm37, 1.0, 0.0
    %v42 = vsel %vm38, 1.0, 0.0
    %44 = vset.pattern.permute.xlu0 0
    %45 = vperm.xlu0 %44, %v24
    %v46 = vpop.permute.xlu0 %45
    %49 = vset.pattern.permute.xlu0 0
    %50 = vperm.xlu0 %49, %v25
    %v51 = vpop.permute.xlu0 %50
    %54 = vset.pattern.permute.xlu0 0
    %55 = vperm.xlu0 %54, %v26
    %v56 = vpop.permute.xlu0 %55
    %59 = vset.pattern.permute.xlu0 0
    %60 = vperm.xlu0 %59, %v27
    %v61 = vpop.permute.xlu0 %60
    %v63 = vmul.f32 %v46, %v39
    %v64 = vmul.f32 %v51, %v40
    %v65 = vmul.f32 %v56, %v41
    %v66 = vmul.f32 %v61, %v42
    %vm67 = vcmask 261120
    %v68 = vsel %vm67, %v63, 0.0
    %v69 = vsel %vm67, %v64, 0.0
    %v70 = vadd.f32 %v68, %v69
    %v71 = vsel %vm67, %v65, 0.0
    %v72 = vadd.f32 %v70, %v71
    %v73 = vsel %vm67, %v66, 0.0
    %v74 = vadd.f32 %v72, %v73
    %v75 = vrot.slane %v74, 4
    %v76 = vadd.f32 %v74, %v75
    %v77 = vrot.slane %v76, 2
    %v78 = vadd.f32 %v76, %v77
    %v79 = vrot.slane %v78, 1
    %v80 = vadd.f32 %v78, %v79
    %81 = vset.pattern.permute.xlu0 1
    %82 = vperm.xlu0 %81, %v24
    %v83 = vpop.permute.xlu0 %82
    %85 = vset.pattern.permute.xlu0 1
    %86 = vperm.xlu0 %85, %v25
    %v87 = vpop.permute.xlu0 %86
    %89 = vset.pattern.permute.xlu0 1
    %90 = vperm.xlu0 %89, %v26
    %v91 = vpop.permute.xlu0 %90
    %93 = vset.pattern.permute.xlu0 1
    %94 = vperm.xlu0 %93, %v27
    %v95 = vpop.permute.xlu0 %94
    %v97 = vmul.f32 %v83, %v39
    %v98 = vmul.f32 %v87, %v40
    %v99 = vmul.f32 %v91, %v41
    %v100 = vmul.f32 %v95, %v42
    %v101 = vsel %vm67, %v97, 0.0
    %v102 = vsel %vm67, %v98, 0.0
    %v103 = vadd.f32 %v101, %v102
    %v104 = vsel %vm67, %v99, 0.0
    %v105 = vadd.f32 %v103, %v104
    %v106 = vsel %vm67, %v100, 0.0
    %v107 = vadd.f32 %v105, %v106
    %v108 = vrot.slane %v107, 4
    %v109 = vadd.f32 %v107, %v108
    %v110 = vrot.slane %v109, 2
    %v111 = vadd.f32 %v109, %v110
    %v112 = vrot.slane %v111, 1
    %v113 = vadd.f32 %v111, %v112
    %114 = vset.pattern.permute.xlu0 2
    %115 = vperm.xlu0 %114, %v24
    %v116 = vpop.permute.xlu0 %115
    %118 = vset.pattern.permute.xlu0 2
    %119 = vperm.xlu0 %118, %v25
    %v120 = vpop.permute.xlu0 %119
    %122 = vset.pattern.permute.xlu0 2
    %123 = vperm.xlu0 %122, %v26
    %v124 = vpop.permute.xlu0 %123
    %126 = vset.pattern.permute.xlu0 2
    %127 = vperm.xlu0 %126, %v27
    %v128 = vpop.permute.xlu0 %127
    %v130 = vmul.f32 %v116, %v39
    %v131 = vmul.f32 %v120, %v40
    %v132 = vmul.f32 %v124, %v41
    %v133 = vmul.f32 %v128, %v42
    %v134 = vsel %vm67, %v130, 0.0
    %v135 = vsel %vm67, %v131, 0.0
    %v136 = vadd.f32 %v134, %v135
    %v137 = vsel %vm67, %v132, 0.0
    %v138 = vadd.f32 %v136, %v137
    %v139 = vsel %vm67, %v133, 0.0
    %v140 = vadd.f32 %v138, %v139
    %v141 = vrot.slane %v140, 4
    %v142 = vadd.f32 %v140, %v141
    %v143 = vrot.slane %v142, 2
    %v144 = vadd.f32 %v142, %v143
    %v145 = vrot.slane %v144, 1
    %v146 = vadd.f32 %v144, %v145
    %s147 = sld [smem:[#allocation2]]
    %v148 = vstv %s147
    %v149 = vmul.f32 %v24, %v148
    %v150 = vmul.f32 %v25, %v148
    %v151 = vmul.f32 %v26, %v148
    %v152 = vmul.f32 %v27, %v148
    %v153 = vmul.f32 %v80, %v148
    %s154 = sld [smem:[#allocation2 + $0x2]]
    %v155 = vstv %s154
    %v156 = vmul.f32 %v24, %v155
    %v157 = vmul.f32 %v25, %v155
    %v158 = vmul.f32 %v26, %v155
    %v159 = vmul.f32 %v27, %v155
    %164 = vrot.lane.b32.xlu0 %v156, 127
    %v165 = vpop.permute.xlu0 %164
    %166 = vrot.lane.b32.xlu0 %v157, 127
    %v167 = vpop.permute.xlu0 %166
    %168 = vrot.lane.b32.xlu0 %v158, 127
    %v169 = vpop.permute.xlu0 %168
    %170 = vrot.lane.b32.xlu0 %v159, 127
    %v171 = vpop.permute.xlu0 %170
    %v176 = vadd.f32 %v149, %v165
    %v177 = vadd.f32 %v150, %v167
    %v178 = vadd.f32 %v151, %v169
    %v179 = vadd.f32 %v152, %v171
    %v180 = vmul.f32 %v113, %v155
    %v181 = vadd.f32 %v153, %v180
    %s182 = sld [smem:[#allocation2 + $0x4]]
    %v183 = vstv %s182
    %v184 = vmul.f32 %v24, %v183
    %v185 = vmul.f32 %v25, %v183
    %v186 = vmul.f32 %v26, %v183
    %v187 = vmul.f32 %v27, %v183
    %192 = vrot.lane.b32.xlu0 %v184, 126
    %v193 = vpop.permute.xlu0 %192
    %194 = vrot.lane.b32.xlu0 %v185, 126
    %v195 = vpop.permute.xlu0 %194
    %196 = vrot.lane.b32.xlu0 %v186, 126
    %v197 = vpop.permute.xlu0 %196
    %198 = vrot.lane.b32.xlu0 %v187, 126
    %v199 = vpop.permute.xlu0 %198
    %v204 = vadd.f32 %v176, %v193
    %v205 = vadd.f32 %v177, %v195
    %v206 = vadd.f32 %v178, %v197
    %v207 = vadd.f32 %v179, %v199
    %v208 = vmul.f32 %v146, %v183
    %v209 = vadd.f32 %v181, %v208
    %211 = vset.pattern.permute.xlu0 0
    %212 = vperm.xlu0 %211, %v204
    %v213 = vpop.permute.xlu0 %212
    %216 = vset.pattern.permute.xlu0 0
    %217 = vperm.xlu0 %216, %v205
    %v218 = vpop.permute.xlu0 %217
    %221 = vset.pattern.permute.xlu0 0
    %222 = vperm.xlu0 %221, %v206
    %v223 = vpop.permute.xlu0 %222
    %226 = vset.pattern.permute.xlu0 0
    %227 = vperm.xlu0 %226, %v207
    %v228 = vpop.permute.xlu0 %227
    %v230 = vsub.f32 %v209, %v213
    %v231 = vsub.f32 %v209, %v218
    %v232 = vsub.f32 %v209, %v223
    %v233 = vsub.f32 %v209, %v228
    %v234 = vmul.f32 %v230, %v230
    %v235 = vmul.f32 %v231, %v231
    %v236 = vmul.f32 %v232, %v232
    %v237 = vmul.f32 %v233, %v233
    %s238 = sld [smem:[#allocation2 + $0x1]]
    %v239 = vstv %s238
    %v240 = vmul.f32 %v24, %v239
    %v241 = vmul.f32 %v25, %v239
    %v242 = vmul.f32 %v26, %v239
    %v243 = vmul.f32 %v27, %v239
    %v244 = vmul.f32 %v80, %v239
    %s245 = sld [smem:[#allocation2 + $0x3]]
    %v246 = vstv %s245
    %v247 = vmul.f32 %v24, %v246
    %v248 = vmul.f32 %v25, %v246
    %v249 = vmul.f32 %v26, %v246
    %v250 = vmul.f32 %v27, %v246
    %255 = vrot.lane.b32.xlu0 %v247, 127
    %v256 = vpop.permute.xlu0 %255
    %257 = vrot.lane.b32.xlu0 %v248, 127
    %v258 = vpop.permute.xlu0 %257
    %259 = vrot.lane.b32.xlu0 %v249, 127
    %v260 = vpop.permute.xlu0 %259
    %261 = vrot.lane.b32.xlu0 %v250, 127
    %v262 = vpop.permute.xlu0 %261
    %v267 = vadd.f32 %v240, %v256
    %v268 = vadd.f32 %v241, %v258
    %v269 = vadd.f32 %v242, %v260
    %v270 = vadd.f32 %v243, %v262
    %v271 = vmul.f32 %v113, %v246
    %v272 = vadd.f32 %v244, %v271
    %s273 = sld [smem:[#allocation2 + $0x5]]
    %v274 = vstv %s273
    %v275 = vmul.f32 %v24, %v274
    %v276 = vmul.f32 %v25, %v274
    %v277 = vmul.f32 %v26, %v274
    %v278 = vmul.f32 %v27, %v274
    %283 = vrot.lane.b32.xlu0 %v275, 126
    %v284 = vpop.permute.xlu0 %283
    %285 = vrot.lane.b32.xlu0 %v276, 126
    %v286 = vpop.permute.xlu0 %285
    %287 = vrot.lane.b32.xlu0 %v277, 126
    %v288 = vpop.permute.xlu0 %287
    %289 = vrot.lane.b32.xlu0 %v278, 126
    %v290 = vpop.permute.xlu0 %289
    %v295 = vadd.f32 %v267, %v284
    %v296 = vadd.f32 %v268, %v286
    %v297 = vadd.f32 %v269, %v288
    %v298 = vadd.f32 %v270, %v290
    %v299 = vmul.f32 %v146, %v274
    %v300 = vadd.f32 %v272, %v299
    %302 = vset.pattern.permute.xlu0 0
    %303 = vperm.xlu0 %302, %v295
    %v304 = vpop.permute.xlu0 %303
    %307 = vset.pattern.permute.xlu0 0
    %308 = vperm.xlu0 %307, %v296
    %v309 = vpop.permute.xlu0 %308
    %312 = vset.pattern.permute.xlu0 0
    %313 = vperm.xlu0 %312, %v297
    %v314 = vpop.permute.xlu0 %313
    %317 = vset.pattern.permute.xlu0 0
    %318 = vperm.xlu0 %317, %v298
    %v319 = vpop.permute.xlu0 %318
    %v321 = vsub.f32 %v300, %v304
    %v322 = vsub.f32 %v300, %v309
    %v323 = vsub.f32 %v300, %v314
    %v324 = vsub.f32 %v300, %v319
    %v325 = vmul.f32 %v321, %v321
    %v326 = vmul.f32 %v322, %v322
    %v327 = vmul.f32 %v323, %v323
    %v328 = vmul.f32 %v324, %v324
    %v329 = vadd.f32 %v234, %v325
    %v330 = vadd.f32 %v235, %v326
    %v331 = vadd.f32 %v236, %v327
    %v332 = vadd.f32 %v237, %v328
    %v333 = vmul.f32 %v329, -10.0
    %v334 = vmul.f32 %v330, -10.0
    %v335 = vmul.f32 %v331, -10.0
    %v336 = vmul.f32 %v332, -10.0
    %v337 = vmul.f32 %v333, 1.442695
    %v338 = vpow.pop %v337
    %v339 = vmul.f32 %v334, 1.442695
    %v340 = vpow.pop %v339
    %v341 = vmul.f32 %v335, 1.442695
    %v342 = vpow.pop %v341
    %v343 = vmul.f32 %v336, 1.442695
    %v344 = vpow.pop %v343
    %vm345 = vcmp.ge.s32.totalorder %v29, 0
    %vm346 = vcmp.ge.s32.totalorder %v30, 0
    %vm347 = vcmp.ge.s32.totalorder %v31, 0
    %vm348 = vcmp.ge.s32.totalorder %v32, 0
    %vm349 = vcmp.lt.s32.totalorder %v29, 16
    %vm350 = vcmp.lt.s32.totalorder %v30, 16
    %vm351 = vcmp.lt.s32.totalorder %v31, 16
    %vm352 = vcmp.lt.s32.totalorder %v32, 16
    %vm353 = vmand %vm345, %vm349
    %vm354 = vmand %vm346, %vm350
    %vm355 = vmand %vm347, %vm351
    %vm356 = vmand %vm348, %vm352
    %vm357 = vcmp.ge.s32.totalorder %v34, 0
    %vm358 = vmand %vm353, %vm357
    %vm359 = vmand %vm354, %vm357
    %vm360 = vmand %vm355, %vm357
    %vm361 = vmand %vm356, %vm357
    %vm362 = vcmp.lt.s32.totalorder %v34, 16
    %vm363 = vmand %vm358, %vm362
    %vm364 = vmand %vm359, %vm362
    %vm365 = vmand %vm360, %vm362
    %vm366 = vmand %vm361, %vm362
    %vm367 = vcmp.ge.s32.totalorder %v29, 16
    %vm368 = vcmp.ge.s32.totalorder %v30, 16
    %vm369 = vcmp.ge.s32.totalorder %v31, 16
    %vm370 = vcmp.ge.s32.totalorder %v32, 16
    %vm371 = vcmp.lt.s32.totalorder %v29, 32
    %vm372 = vcmp.lt.s32.totalorder %v30, 32
    %vm373 = vcmp.lt.s32.totalorder %v31, 32
    %vm374 = vcmp.lt.s32.totalorder %v32, 32
    %vm375 = vmand %vm367, %vm371
    %vm376 = vmand %vm368, %vm372
    %vm377 = vmand %vm369, %vm373
    %vm378 = vmand %vm370, %vm374
    %vm379 = vcmp.ge.s32.totalorder %v34, 16
    %vm380 = vmand %vm375, %vm379
    %vm381 = vmand %vm376, %vm379
    %vm382 = vmand %vm377, %vm379
    %vm383 = vmand %vm378, %vm379
    %vm384 = vcmp.lt.s32.totalorder %v34, 32
    %vm385 = vmand %vm380, %vm384
    %vm386 = vmand %vm381, %vm384
    %vm387 = vmand %vm382, %vm384
    %vm388 = vmand %vm383, %vm384
    %vm389 = vmor %vm363, %vm385
    %vm390 = vmor %vm364, %vm386
    %vm391 = vmor %vm365, %vm387
    %vm392 = vmor %vm366, %vm388
    %v393 = vsel %vm389, %v329, 1e+30
    %v394 = vsel %vm390, %v330, 1e+30
    %v395 = vsel %vm391, %v331, 1e+30
    %v396 = vsel %vm392, %v332, 1e+30
    %v397 = vlaneseq
    %v398 = vshrl.u32 %v397, 7
    %v399 = vsub.s32 0, %v398
    %v400 = vrot.slane %v393, %v399
    %vm401 = vcmp.lt.f32.partialorder %v400, %v393
    %vm402 = vcmp.lt.f32.partialorder %v400, %v394
    %vm403 = vcmp.lt.f32.partialorder %v400, %v395
    %vm404 = vcmp.lt.f32.partialorder %v400, %v396
    %vm405 = vcmp.eq.f32.partialorder %v400, %v393
    %vm406 = vcmp.eq.f32.partialorder %v400, %v394
    %vm407 = vcmp.eq.f32.partialorder %v400, %v395
    %vm408 = vcmp.eq.f32.partialorder %v400, %v396
    %vm409 = vcmp.gt.s32.totalorder %v29, 0
    %vm410 = vcmp.gt.s32.totalorder %v30, 0
    %vm411 = vcmp.gt.s32.totalorder %v31, 0
    %vm412 = vcmp.gt.s32.totalorder %v32, 0
    %vm413 = vmand %vm405, %vm409
    %vm414 = vmand %vm406, %vm410
    %vm415 = vmand %vm407, %vm411
    %vm416 = vmand %vm408, %vm412
    %vm417 = vmor %vm401, %vm413
    %vm418 = vmor %vm402, %vm414
    %vm419 = vmor %vm403, %vm415
    %vm420 = vmor %vm404, %vm416
    %v421 = vsel %vm417, 1.0, 0.0
    %v422 = vsel %vm418, 1.0, 0.0
    %v423 = vsel %vm419, 1.0, 0.0
    %v424 = vsel %vm420, 1.0, 0.0
    %v425 = vadd.f32 %v421, 0.0
    %v426 = vadd.f32 %v422, 0.0
    %v427 = vadd.f32 %v423, 0.0
    %v428 = vadd.f32 %v424, 0.0
    %v429 = vlaneseq
    %v430 = vshrl.u32 %v429, 7
    %v431 = vsub.s32 1, %v430
    %v432 = vrot.slane %v393, %v431
    %vm433 = vcmp.lt.f32.partialorder %v432, %v393
    %vm434 = vcmp.lt.f32.partialorder %v432, %v394
    %vm435 = vcmp.lt.f32.partialorder %v432, %v395
    %vm436 = vcmp.lt.f32.partialorder %v432, %v396
    %vm437 = vcmp.eq.f32.partialorder %v432, %v393
    %vm438 = vcmp.eq.f32.partialorder %v432, %v394
    %vm439 = vcmp.eq.f32.partialorder %v432, %v395
    %vm440 = vcmp.eq.f32.partialorder %v432, %v396
    %vm441 = vcmp.gt.s32.totalorder %v29, 1
    %vm442 = vcmp.gt.s32.totalorder %v30, 1
    %vm443 = vcmp.gt.s32.totalorder %v31, 1
    %vm444 = vcmp.gt.s32.totalorder %v32, 1
    %vm445 = vmand %vm437, %vm441
    %vm446 = vmand %vm438, %vm442
    %vm447 = vmand %vm439, %vm443
    %vm448 = vmand %vm440, %vm444
    %vm449 = vmor %vm433, %vm445
    %vm450 = vmor %vm434, %vm446
    %vm451 = vmor %vm435, %vm447
    %vm452 = vmor %vm436, %vm448
    %v453 = vsel %vm449, 1.0, 0.0
    %v454 = vsel %vm450, 1.0, 0.0
    %v455 = vsel %vm451, 1.0, 0.0
    %v456 = vsel %vm452, 1.0, 0.0
    %v457 = vadd.f32 %v425, %v453
    %v458 = vadd.f32 %v426, %v454
    %v459 = vadd.f32 %v427, %v455
    %v460 = vadd.f32 %v428, %v456
    %v461 = vlaneseq
    %v462 = vshrl.u32 %v461, 7
    %v463 = vsub.s32 2, %v462
    %v464 = vrot.slane %v393, %v463
    %vm465 = vcmp.lt.f32.partialorder %v464, %v393
    %vm466 = vcmp.lt.f32.partialorder %v464, %v394
    %vm467 = vcmp.lt.f32.partialorder %v464, %v395
    %vm468 = vcmp.lt.f32.partialorder %v464, %v396
    %vm469 = vcmp.eq.f32.partialorder %v464, %v393
    %vm470 = vcmp.eq.f32.partialorder %v464, %v394
    %vm471 = vcmp.eq.f32.partialorder %v464, %v395
    %vm472 = vcmp.eq.f32.partialorder %v464, %v396
    %vm473 = vcmp.gt.s32.totalorder %v29, 2
    %vm474 = vcmp.gt.s32.totalorder %v30, 2
    %vm475 = vcmp.gt.s32.totalorder %v31, 2
    %vm476 = vcmp.gt.s32.totalorder %v32, 2
    %vm477 = vmand %vm469, %vm473
    %vm478 = vmand %vm470, %vm474
    %vm479 = vmand %vm471, %vm475
    %vm480 = vmand %vm472, %vm476
    %vm481 = vmor %vm465, %vm477
    %vm482 = vmor %vm466, %vm478
    %vm483 = vmor %vm467, %vm479
    %vm484 = vmor %vm468, %vm480
    %v485 = vsel %vm481, 1.0, 0.0
    %v486 = vsel %vm482, 1.0, 0.0
    %v487 = vsel %vm483, 1.0, 0.0
    %v488 = vsel %vm484, 1.0, 0.0
    %v489 = vadd.f32 %v457, %v485
    %v490 = vadd.f32 %v458, %v486
    %v491 = vadd.f32 %v459, %v487
    %v492 = vadd.f32 %v460, %v488
    %v493 = vlaneseq
    %v494 = vshrl.u32 %v493, 7
    %v495 = vsub.s32 3, %v494
    %v496 = vrot.slane %v393, %v495
    %vm497 = vcmp.lt.f32.partialorder %v496, %v393
    %vm498 = vcmp.lt.f32.partialorder %v496, %v394
    %vm499 = vcmp.lt.f32.partialorder %v496, %v395
    %vm500 = vcmp.lt.f32.partialorder %v496, %v396
    %vm501 = vcmp.eq.f32.partialorder %v496, %v393
    %vm502 = vcmp.eq.f32.partialorder %v496, %v394
    %vm503 = vcmp.eq.f32.partialorder %v496, %v395
    %vm504 = vcmp.eq.f32.partialorder %v496, %v396
    %vm505 = vcmp.gt.s32.totalorder %v29, 3
    %vm506 = vcmp.gt.s32.totalorder %v30, 3
    %vm507 = vcmp.gt.s32.totalorder %v31, 3
    %vm508 = vcmp.gt.s32.totalorder %v32, 3
    %vm509 = vmand %vm501, %vm505
    %vm510 = vmand %vm502, %vm506
    %vm511 = vmand %vm503, %vm507
    %vm512 = vmand %vm504, %vm508
    %vm513 = vmor %vm497, %vm509
    %vm514 = vmor %vm498, %vm510
    %vm515 = vmor %vm499, %vm511
    %vm516 = vmor %vm500, %vm512
    %v517 = vsel %vm513, 1.0, 0.0
    %v518 = vsel %vm514, 1.0, 0.0
    %v519 = vsel %vm515, 1.0, 0.0
    %v520 = vsel %vm516, 1.0, 0.0
    %v521 = vadd.f32 %v489, %v517
    %v522 = vadd.f32 %v490, %v518
    %v523 = vadd.f32 %v491, %v519
    %v524 = vadd.f32 %v492, %v520
    %v525 = vlaneseq
    %v526 = vshrl.u32 %v525, 7
    %v527 = vsub.s32 4, %v526
    %v528 = vrot.slane %v393, %v527
    %vm529 = vcmp.lt.f32.partialorder %v528, %v393
    %vm530 = vcmp.lt.f32.partialorder %v528, %v394
    %vm531 = vcmp.lt.f32.partialorder %v528, %v395
    %vm532 = vcmp.lt.f32.partialorder %v528, %v396
    %vm533 = vcmp.eq.f32.partialorder %v528, %v393
    %vm534 = vcmp.eq.f32.partialorder %v528, %v394
    %vm535 = vcmp.eq.f32.partialorder %v528, %v395
    %vm536 = vcmp.eq.f32.partialorder %v528, %v396
    %vm537 = vcmp.gt.s32.totalorder %v29, 4
    %vm538 = vcmp.gt.s32.totalorder %v30, 4
    %vm539 = vcmp.gt.s32.totalorder %v31, 4
    %vm540 = vcmp.gt.s32.totalorder %v32, 4
    %vm541 = vmand %vm533, %vm537
    %vm542 = vmand %vm534, %vm538
    %vm543 = vmand %vm535, %vm539
    %vm544 = vmand %vm536, %vm540
    %vm545 = vmor %vm529, %vm541
    %vm546 = vmor %vm530, %vm542
    %vm547 = vmor %vm531, %vm543
    %vm548 = vmor %vm532, %vm544
    %v549 = vsel %vm545, 1.0, 0.0
    %v550 = vsel %vm546, 1.0, 0.0
    %v551 = vsel %vm547, 1.0, 0.0
    %v552 = vsel %vm548, 1.0, 0.0
    %v553 = vadd.f32 %v521, %v549
    %v554 = vadd.f32 %v522, %v550
    %v555 = vadd.f32 %v523, %v551
    %v556 = vadd.f32 %v524, %v552
    %v557 = vlaneseq
    %v558 = vshrl.u32 %v557, 7
    %v559 = vsub.s32 5, %v558
    %v560 = vrot.slane %v393, %v559
    %vm561 = vcmp.lt.f32.partialorder %v560, %v393
    %vm562 = vcmp.lt.f32.partialorder %v560, %v394
    %vm563 = vcmp.lt.f32.partialorder %v560, %v395
    %vm564 = vcmp.lt.f32.partialorder %v560, %v396
    %vm565 = vcmp.eq.f32.partialorder %v560, %v393
    %vm566 = vcmp.eq.f32.partialorder %v560, %v394
    %vm567 = vcmp.eq.f32.partialorder %v560, %v395
    %vm568 = vcmp.eq.f32.partialorder %v560, %v396
    %vm569 = vcmp.gt.s32.totalorder %v29, 5
    %vm570 = vcmp.gt.s32.totalorder %v30, 5
    %vm571 = vcmp.gt.s32.totalorder %v31, 5
    %vm572 = vcmp.gt.s32.totalorder %v32, 5
    %vm573 = vmand %vm565, %vm569
    %vm574 = vmand %vm566, %vm570
    %vm575 = vmand %vm567, %vm571
    %vm576 = vmand %vm568, %vm572
    %vm577 = vmor %vm561, %vm573
    %vm578 = vmor %vm562, %vm574
    %vm579 = vmor %vm563, %vm575
    %vm580 = vmor %vm564, %vm576
    %v581 = vsel %vm577, 1.0, 0.0
    %v582 = vsel %vm578, 1.0, 0.0
    %v583 = vsel %vm579, 1.0, 0.0
    %v584 = vsel %vm580, 1.0, 0.0
    %v585 = vadd.f32 %v553, %v581
    %v586 = vadd.f32 %v554, %v582
    %v587 = vadd.f32 %v555, %v583
    %v588 = vadd.f32 %v556, %v584
    %v589 = vlaneseq
    %v590 = vshrl.u32 %v589, 7
    %v591 = vsub.s32 6, %v590
    %v592 = vrot.slane %v393, %v591
    %vm593 = vcmp.lt.f32.partialorder %v592, %v393
    %vm594 = vcmp.lt.f32.partialorder %v592, %v394
    %vm595 = vcmp.lt.f32.partialorder %v592, %v395
    %vm596 = vcmp.lt.f32.partialorder %v592, %v396
    %vm597 = vcmp.eq.f32.partialorder %v592, %v393
    %vm598 = vcmp.eq.f32.partialorder %v592, %v394
    %vm599 = vcmp.eq.f32.partialorder %v592, %v395
    %vm600 = vcmp.eq.f32.partialorder %v592, %v396
    %vm601 = vcmp.gt.s32.totalorder %v29, 6
    %vm602 = vcmp.gt.s32.totalorder %v30, 6
    %vm603 = vcmp.gt.s32.totalorder %v31, 6
    %vm604 = vcmp.gt.s32.totalorder %v32, 6
    %vm605 = vmand %vm597, %vm601
    %vm606 = vmand %vm598, %vm602
    %vm607 = vmand %vm599, %vm603
    %vm608 = vmand %vm600, %vm604
    %vm609 = vmor %vm593, %vm605
    %vm610 = vmor %vm594, %vm606
    %vm611 = vmor %vm595, %vm607
    %vm612 = vmor %vm596, %vm608
    %v613 = vsel %vm609, 1.0, 0.0
    %v614 = vsel %vm610, 1.0, 0.0
    %v615 = vsel %vm611, 1.0, 0.0
    %v616 = vsel %vm612, 1.0, 0.0
    %v617 = vadd.f32 %v585, %v613
    %v618 = vadd.f32 %v586, %v614
    %v619 = vadd.f32 %v587, %v615
    %v620 = vadd.f32 %v588, %v616
    %v621 = vlaneseq
    %v622 = vshrl.u32 %v621, 7
    %v623 = vsub.s32 7, %v622
    %v624 = vrot.slane %v393, %v623
    %vm625 = vcmp.lt.f32.partialorder %v624, %v393
    %vm626 = vcmp.lt.f32.partialorder %v624, %v394
    %vm627 = vcmp.lt.f32.partialorder %v624, %v395
    %vm628 = vcmp.lt.f32.partialorder %v624, %v396
    %vm629 = vcmp.eq.f32.partialorder %v624, %v393
    %vm630 = vcmp.eq.f32.partialorder %v624, %v394
    %vm631 = vcmp.eq.f32.partialorder %v624, %v395
    %vm632 = vcmp.eq.f32.partialorder %v624, %v396
    %vm633 = vcmp.gt.s32.totalorder %v29, 7
    %vm634 = vcmp.gt.s32.totalorder %v30, 7
    %vm635 = vcmp.gt.s32.totalorder %v31, 7
    %vm636 = vcmp.gt.s32.totalorder %v32, 7
    %vm637 = vmand %vm629, %vm633
    %vm638 = vmand %vm630, %vm634
    %vm639 = vmand %vm631, %vm635
    %vm640 = vmand %vm632, %vm636
    %vm641 = vmor %vm625, %vm637
    %vm642 = vmor %vm626, %vm638
    %vm643 = vmor %vm627, %vm639
    %vm644 = vmor %vm628, %vm640
    %v645 = vsel %vm641, 1.0, 0.0
    %v646 = vsel %vm642, 1.0, 0.0
    %v647 = vsel %vm643, 1.0, 0.0
    %v648 = vsel %vm644, 1.0, 0.0
    %v649 = vadd.f32 %v617, %v645
    %v650 = vadd.f32 %v618, %v646
    %v651 = vadd.f32 %v619, %v647
    %v652 = vadd.f32 %v620, %v648
    %v653 = vlaneseq
    %v654 = vshrl.u32 %v653, 7
    %v655 = vsub.s32 0, %v654
    %v656 = vrot.slane %v394, %v655
    %vm657 = vcmp.lt.f32.partialorder %v656, %v393
    %vm658 = vcmp.lt.f32.partialorder %v656, %v394
    %vm659 = vcmp.lt.f32.partialorder %v656, %v395
    %vm660 = vcmp.lt.f32.partialorder %v656, %v396
    %vm661 = vcmp.eq.f32.partialorder %v656, %v393
    %vm662 = vcmp.eq.f32.partialorder %v656, %v394
    %vm663 = vcmp.eq.f32.partialorder %v656, %v395
    %vm664 = vcmp.eq.f32.partialorder %v656, %v396
    %vm665 = vcmp.gt.s32.totalorder %v29, 8
    %vm666 = vcmp.gt.s32.totalorder %v30, 8
    %vm667 = vcmp.gt.s32.totalorder %v31, 8
    %vm668 = vcmp.gt.s32.totalorder %v32, 8
    %vm669 = vmand %vm661, %vm665
    %vm670 = vmand %vm662, %vm666
    %vm671 = vmand %vm663, %vm667
    %vm672 = vmand %vm664, %vm668
    %vm673 = vmor %vm657, %vm669
    %vm674 = vmor %vm658, %vm670
    %vm675 = vmor %vm659, %vm671
    %vm676 = vmor %vm660, %vm672
    %v677 = vsel %vm673, 1.0, 0.0
    %v678 = vsel %vm674, 1.0, 0.0
    %v679 = vsel %vm675, 1.0, 0.0
    %v680 = vsel %vm676, 1.0, 0.0
    %v681 = vadd.f32 %v649, %v677
    %v682 = vadd.f32 %v650, %v678
    %v683 = vadd.f32 %v651, %v679
    %v684 = vadd.f32 %v652, %v680
    %v685 = vlaneseq
    %v686 = vshrl.u32 %v685, 7
    %v687 = vsub.s32 1, %v686
    %v688 = vrot.slane %v394, %v687
    %vm689 = vcmp.lt.f32.partialorder %v688, %v393
    %vm690 = vcmp.lt.f32.partialorder %v688, %v394
    %vm691 = vcmp.lt.f32.partialorder %v688, %v395
    %vm692 = vcmp.lt.f32.partialorder %v688, %v396
    %vm693 = vcmp.eq.f32.partialorder %v688, %v393
    %vm694 = vcmp.eq.f32.partialorder %v688, %v394
    %vm695 = vcmp.eq.f32.partialorder %v688, %v395
    %vm696 = vcmp.eq.f32.partialorder %v688, %v396
    %vm697 = vcmp.gt.s32.totalorder %v29, 9
    %vm698 = vcmp.gt.s32.totalorder %v30, 9
    %vm699 = vcmp.gt.s32.totalorder %v31, 9
    %vm700 = vcmp.gt.s32.totalorder %v32, 9
    %vm701 = vmand %vm693, %vm697
    %vm702 = vmand %vm694, %vm698
    %vm703 = vmand %vm695, %vm699
    %vm704 = vmand %vm696, %vm700
    %vm705 = vmor %vm689, %vm701
    %vm706 = vmor %vm690, %vm702
    %vm707 = vmor %vm691, %vm703
    %vm708 = vmor %vm692, %vm704
    %v709 = vsel %vm705, 1.0, 0.0
    %v710 = vsel %vm706, 1.0, 0.0
    %v711 = vsel %vm707, 1.0, 0.0
    %v712 = vsel %vm708, 1.0, 0.0
    %v713 = vadd.f32 %v681, %v709
    %v714 = vadd.f32 %v682, %v710
    %v715 = vadd.f32 %v683, %v711
    %v716 = vadd.f32 %v684, %v712
    %v717 = vlaneseq
    %v718 = vshrl.u32 %v717, 7
    %v719 = vsub.s32 2, %v718
    %v720 = vrot.slane %v394, %v719
    %vm721 = vcmp.lt.f32.partialorder %v720, %v393
    %vm722 = vcmp.lt.f32.partialorder %v720, %v394
    %vm723 = vcmp.lt.f32.partialorder %v720, %v395
    %vm724 = vcmp.lt.f32.partialorder %v720, %v396
    %vm725 = vcmp.eq.f32.partialorder %v720, %v393
    %vm726 = vcmp.eq.f32.partialorder %v720, %v394
    %vm727 = vcmp.eq.f32.partialorder %v720, %v395
    %vm728 = vcmp.eq.f32.partialorder %v720, %v396
    %vm729 = vcmp.gt.s32.totalorder %v29, 10
    %vm730 = vcmp.gt.s32.totalorder %v30, 10
    %vm731 = vcmp.gt.s32.totalorder %v31, 10
    %vm732 = vcmp.gt.s32.totalorder %v32, 10
    %vm733 = vmand %vm725, %vm729
    %vm734 = vmand %vm726, %vm730
    %vm735 = vmand %vm727, %vm731
    %vm736 = vmand %vm728, %vm732
    %vm737 = vmor %vm721, %vm733
    %vm738 = vmor %vm722, %vm734
    %vm739 = vmor %vm723, %vm735
    %vm740 = vmor %vm724, %vm736
    %v741 = vsel %vm737, 1.0, 0.0
    %v742 = vsel %vm738, 1.0, 0.0
    %v743 = vsel %vm739, 1.0, 0.0
    %v744 = vsel %vm740, 1.0, 0.0
    %v745 = vadd.f32 %v713, %v741
    %v746 = vadd.f32 %v714, %v742
    %v747 = vadd.f32 %v715, %v743
    %v748 = vadd.f32 %v716, %v744
    %v749 = vlaneseq
    %v750 = vshrl.u32 %v749, 7
    %v751 = vsub.s32 3, %v750
    %v752 = vrot.slane %v394, %v751
    %vm753 = vcmp.lt.f32.partialorder %v752, %v393
    %vm754 = vcmp.lt.f32.partialorder %v752, %v394
    %vm755 = vcmp.lt.f32.partialorder %v752, %v395
    %vm756 = vcmp.lt.f32.partialorder %v752, %v396
    %vm757 = vcmp.eq.f32.partialorder %v752, %v393
    %vm758 = vcmp.eq.f32.partialorder %v752, %v394
    %vm759 = vcmp.eq.f32.partialorder %v752, %v395
    %vm760 = vcmp.eq.f32.partialorder %v752, %v396
    %vm761 = vcmp.gt.s32.totalorder %v29, 11
    %vm762 = vcmp.gt.s32.totalorder %v30, 11
    %vm763 = vcmp.gt.s32.totalorder %v31, 11
    %vm764 = vcmp.gt.s32.totalorder %v32, 11
    %vm765 = vmand %vm757, %vm761
    %vm766 = vmand %vm758, %vm762
    %vm767 = vmand %vm759, %vm763
    %vm768 = vmand %vm760, %vm764
    %vm769 = vmor %vm753, %vm765
    %vm770 = vmor %vm754, %vm766
    %vm771 = vmor %vm755, %vm767
    %vm772 = vmor %vm756, %vm768
    %v773 = vsel %vm769, 1.0, 0.0
    %v774 = vsel %vm770, 1.0, 0.0
    %v775 = vsel %vm771, 1.0, 0.0
    %v776 = vsel %vm772, 1.0, 0.0
    %v777 = vadd.f32 %v745, %v773
    %v778 = vadd.f32 %v746, %v774
    %v779 = vadd.f32 %v747, %v775
    %v780 = vadd.f32 %v748, %v776
    %v781 = vlaneseq
    %v782 = vshrl.u32 %v781, 7
    %v783 = vsub.s32 4, %v782
    %v784 = vrot.slane %v394, %v783
    %vm785 = vcmp.lt.f32.partialorder %v784, %v393
    %vm786 = vcmp.lt.f32.partialorder %v784, %v394
    %vm787 = vcmp.lt.f32.partialorder %v784, %v395
    %vm788 = vcmp.lt.f32.partialorder %v784, %v396
    %vm789 = vcmp.eq.f32.partialorder %v784, %v393
    %vm790 = vcmp.eq.f32.partialorder %v784, %v394
    %vm791 = vcmp.eq.f32.partialorder %v784, %v395
    %vm792 = vcmp.eq.f32.partialorder %v784, %v396
    %vm793 = vcmp.gt.s32.totalorder %v29, 12
    %vm794 = vcmp.gt.s32.totalorder %v30, 12
    %vm795 = vcmp.gt.s32.totalorder %v31, 12
    %vm796 = vcmp.gt.s32.totalorder %v32, 12
    %vm797 = vmand %vm789, %vm793
    %vm798 = vmand %vm790, %vm794
    %vm799 = vmand %vm791, %vm795
    %vm800 = vmand %vm792, %vm796
    %vm801 = vmor %vm785, %vm797
    %vm802 = vmor %vm786, %vm798
    %vm803 = vmor %vm787, %vm799
    %vm804 = vmor %vm788, %vm800
    %v805 = vsel %vm801, 1.0, 0.0
    %v806 = vsel %vm802, 1.0, 0.0
    %v807 = vsel %vm803, 1.0, 0.0
    %v808 = vsel %vm804, 1.0, 0.0
    %v809 = vadd.f32 %v777, %v805
    %v810 = vadd.f32 %v778, %v806
    %v811 = vadd.f32 %v779, %v807
    %v812 = vadd.f32 %v780, %v808
    %v813 = vlaneseq
    %v814 = vshrl.u32 %v813, 7
    %v815 = vsub.s32 5, %v814
    %v816 = vrot.slane %v394, %v815
    %vm817 = vcmp.lt.f32.partialorder %v816, %v393
    %vm818 = vcmp.lt.f32.partialorder %v816, %v394
    %vm819 = vcmp.lt.f32.partialorder %v816, %v395
    %vm820 = vcmp.lt.f32.partialorder %v816, %v396
    %vm821 = vcmp.eq.f32.partialorder %v816, %v393
    %vm822 = vcmp.eq.f32.partialorder %v816, %v394
    %vm823 = vcmp.eq.f32.partialorder %v816, %v395
    %vm824 = vcmp.eq.f32.partialorder %v816, %v396
    %vm825 = vcmp.gt.s32.totalorder %v29, 13
    %vm826 = vcmp.gt.s32.totalorder %v30, 13
    %vm827 = vcmp.gt.s32.totalorder %v31, 13
    %vm828 = vcmp.gt.s32.totalorder %v32, 13
    %vm829 = vmand %vm821, %vm825
    %vm830 = vmand %vm822, %vm826
    %vm831 = vmand %vm823, %vm827
    %vm832 = vmand %vm824, %vm828
    %vm833 = vmor %vm817, %vm829
    %vm834 = vmor %vm818, %vm830
    %vm835 = vmor %vm819, %vm831
    %vm836 = vmor %vm820, %vm832
    %v837 = vsel %vm833, 1.0, 0.0
    %v838 = vsel %vm834, 1.0, 0.0
    %v839 = vsel %vm835, 1.0, 0.0
    %v840 = vsel %vm836, 1.0, 0.0
    %v841 = vadd.f32 %v809, %v837
    %v842 = vadd.f32 %v810, %v838
    %v843 = vadd.f32 %v811, %v839
    %v844 = vadd.f32 %v812, %v840
    %v845 = vlaneseq
    %v846 = vshrl.u32 %v845, 7
    %v847 = vsub.s32 6, %v846
    %v848 = vrot.slane %v394, %v847
    %vm849 = vcmp.lt.f32.partialorder %v848, %v393
    %vm850 = vcmp.lt.f32.partialorder %v848, %v394
    %vm851 = vcmp.lt.f32.partialorder %v848, %v395
    %vm852 = vcmp.lt.f32.partialorder %v848, %v396
    %vm853 = vcmp.eq.f32.partialorder %v848, %v393
    %vm854 = vcmp.eq.f32.partialorder %v848, %v394
    %vm855 = vcmp.eq.f32.partialorder %v848, %v395
    %vm856 = vcmp.eq.f32.partialorder %v848, %v396
    %vm857 = vcmp.gt.s32.totalorder %v29, 14
    %vm858 = vcmp.gt.s32.totalorder %v30, 14
    %vm859 = vcmp.gt.s32.totalorder %v31, 14
    %vm860 = vcmp.gt.s32.totalorder %v32, 14
    %vm861 = vmand %vm853, %vm857
    %vm862 = vmand %vm854, %vm858
    %vm863 = vmand %vm855, %vm859
    %vm864 = vmand %vm856, %vm860
    %vm865 = vmor %vm849, %vm861
    %vm866 = vmor %vm850, %vm862
    %vm867 = vmor %vm851, %vm863
    %vm868 = vmor %vm852, %vm864
    %v869 = vsel %vm865, 1.0, 0.0
    %v870 = vsel %vm866, 1.0, 0.0
    %v871 = vsel %vm867, 1.0, 0.0
    %v872 = vsel %vm868, 1.0, 0.0
    %v873 = vadd.f32 %v841, %v869
    %v874 = vadd.f32 %v842, %v870
    %v875 = vadd.f32 %v843, %v871
    %v876 = vadd.f32 %v844, %v872
    %v877 = vlaneseq
    %v878 = vshrl.u32 %v877, 7
    %v879 = vsub.s32 7, %v878
    %v880 = vrot.slane %v394, %v879
    %vm881 = vcmp.lt.f32.partialorder %v880, %v393
    %vm882 = vcmp.lt.f32.partialorder %v880, %v394
    %vm883 = vcmp.lt.f32.partialorder %v880, %v395
    %vm884 = vcmp.lt.f32.partialorder %v880, %v396
    %vm885 = vcmp.eq.f32.partialorder %v880, %v393
    %vm886 = vcmp.eq.f32.partialorder %v880, %v394
    %vm887 = vcmp.eq.f32.partialorder %v880, %v395
    %vm888 = vcmp.eq.f32.partialorder %v880, %v396
    %vm889 = vcmp.gt.s32.totalorder %v29, 15
    %vm890 = vcmp.gt.s32.totalorder %v30, 15
    %vm891 = vcmp.gt.s32.totalorder %v31, 15
    %vm892 = vcmp.gt.s32.totalorder %v32, 15
    %vm893 = vmand %vm885, %vm889
    %vm894 = vmand %vm886, %vm890
    %vm895 = vmand %vm887, %vm891
    %vm896 = vmand %vm888, %vm892
    %vm897 = vmor %vm881, %vm893
    %vm898 = vmor %vm882, %vm894
    %vm899 = vmor %vm883, %vm895
    %vm900 = vmor %vm884, %vm896
    %v901 = vsel %vm897, 1.0, 0.0
    %v902 = vsel %vm898, 1.0, 0.0
    %v903 = vsel %vm899, 1.0, 0.0
    %v904 = vsel %vm900, 1.0, 0.0
    %v905 = vadd.f32 %v873, %v901
    %v906 = vadd.f32 %v874, %v902
    %v907 = vadd.f32 %v875, %v903
    %v908 = vadd.f32 %v876, %v904
    %v909 = vlaneseq
    %v910 = vshrl.u32 %v909, 7
    %v911 = vsub.s32 0, %v910
    %v912 = vrot.slane %v395, %v911
    %vm913 = vcmp.lt.f32.partialorder %v912, %v393
    %vm914 = vcmp.lt.f32.partialorder %v912, %v394
    %vm915 = vcmp.lt.f32.partialorder %v912, %v395
    %vm916 = vcmp.lt.f32.partialorder %v912, %v396
    %vm917 = vcmp.eq.f32.partialorder %v912, %v393
    %vm918 = vcmp.eq.f32.partialorder %v912, %v394
    %vm919 = vcmp.eq.f32.partialorder %v912, %v395
    %vm920 = vcmp.eq.f32.partialorder %v912, %v396
    %vm921 = vcmp.gt.s32.totalorder %v29, 16
    %vm922 = vcmp.gt.s32.totalorder %v30, 16
    %vm923 = vcmp.gt.s32.totalorder %v31, 16
    %vm924 = vcmp.gt.s32.totalorder %v32, 16
    %vm925 = vmand %vm917, %vm921
    %vm926 = vmand %vm918, %vm922
    %vm927 = vmand %vm919, %vm923
    %vm928 = vmand %vm920, %vm924
    %vm929 = vmor %vm913, %vm925
    %vm930 = vmor %vm914, %vm926
    %vm931 = vmor %vm915, %vm927
    %vm932 = vmor %vm916, %vm928
    %v933 = vsel %vm929, 1.0, 0.0
    %v934 = vsel %vm930, 1.0, 0.0
    %v935 = vsel %vm931, 1.0, 0.0
    %v936 = vsel %vm932, 1.0, 0.0
    %v937 = vadd.f32 %v905, %v933
    %v938 = vadd.f32 %v906, %v934
    %v939 = vadd.f32 %v907, %v935
    %v940 = vadd.f32 %v908, %v936
    %v941 = vlaneseq
    %v942 = vshrl.u32 %v941, 7
    %v943 = vsub.s32 1, %v942
    %v944 = vrot.slane %v395, %v943
    %vm945 = vcmp.lt.f32.partialorder %v944, %v393
    %vm946 = vcmp.lt.f32.partialorder %v944, %v394
    %vm947 = vcmp.lt.f32.partialorder %v944, %v395
    %vm948 = vcmp.lt.f32.partialorder %v944, %v396
    %vm949 = vcmp.eq.f32.partialorder %v944, %v393
    %vm950 = vcmp.eq.f32.partialorder %v944, %v394
    %vm951 = vcmp.eq.f32.partialorder %v944, %v395
    %vm952 = vcmp.eq.f32.partialorder %v944, %v396
    %vm953 = vcmp.gt.s32.totalorder %v29, 17
    %vm954 = vcmp.gt.s32.totalorder %v30, 17
    %vm955 = vcmp.gt.s32.totalorder %v31, 17
    %vm956 = vcmp.gt.s32.totalorder %v32, 17
    %vm957 = vmand %vm949, %vm953
    %vm958 = vmand %vm950, %vm954
    %vm959 = vmand %vm951, %vm955
    %vm960 = vmand %vm952, %vm956
    %vm961 = vmor %vm945, %vm957
    %vm962 = vmor %vm946, %vm958
    %vm963 = vmor %vm947, %vm959
    %vm964 = vmor %vm948, %vm960
    %v965 = vsel %vm961, 1.0, 0.0
    %v966 = vsel %vm962, 1.0, 0.0
    %v967 = vsel %vm963, 1.0, 0.0
    %v968 = vsel %vm964, 1.0, 0.0
    %v969 = vadd.f32 %v937, %v965
    %v970 = vadd.f32 %v938, %v966
    %v971 = vadd.f32 %v939, %v967
    %v972 = vadd.f32 %v940, %v968
    %v973 = vlaneseq
    %v974 = vshrl.u32 %v973, 7
    %v975 = vsub.s32 2, %v974
    %v976 = vrot.slane %v395, %v975
    %vm977 = vcmp.lt.f32.partialorder %v976, %v393
    %vm978 = vcmp.lt.f32.partialorder %v976, %v394
    %vm979 = vcmp.lt.f32.partialorder %v976, %v395
    %vm980 = vcmp.lt.f32.partialorder %v976, %v396
    %vm981 = vcmp.eq.f32.partialorder %v976, %v393
    %vm982 = vcmp.eq.f32.partialorder %v976, %v394
    %vm983 = vcmp.eq.f32.partialorder %v976, %v395
    %vm984 = vcmp.eq.f32.partialorder %v976, %v396
    %vm985 = vcmp.gt.s32.totalorder %v29, 18
    %vm986 = vcmp.gt.s32.totalorder %v30, 18
    %vm987 = vcmp.gt.s32.totalorder %v31, 18
    %vm988 = vcmp.gt.s32.totalorder %v32, 18
    %vm989 = vmand %vm981, %vm985
    %vm990 = vmand %vm982, %vm986
    %vm991 = vmand %vm983, %vm987
    %vm992 = vmand %vm984, %vm988
    %vm993 = vmor %vm977, %vm989
    %vm994 = vmor %vm978, %vm990
    %vm995 = vmor %vm979, %vm991
    %vm996 = vmor %vm980, %vm992
    %v997 = vsel %vm993, 1.0, 0.0
    %v998 = vsel %vm994, 1.0, 0.0
    %v999 = vsel %vm995, 1.0, 0.0
    %v1000 = vsel %vm996, 1.0, 0.0
    %v1001 = vadd.f32 %v969, %v997
    %v1002 = vadd.f32 %v970, %v998
    %v1003 = vadd.f32 %v971, %v999
    %v1004 = vadd.f32 %v972, %v1000
    %v1005 = vlaneseq
    %v1006 = vshrl.u32 %v1005, 7
    %v1007 = vsub.s32 3, %v1006
    %v1008 = vrot.slane %v395, %v1007
    %vm1009 = vcmp.lt.f32.partialorder %v1008, %v393
    %vm1010 = vcmp.lt.f32.partialorder %v1008, %v394
    %vm1011 = vcmp.lt.f32.partialorder %v1008, %v395
    %vm1012 = vcmp.lt.f32.partialorder %v1008, %v396
    %vm1013 = vcmp.eq.f32.partialorder %v1008, %v393
    %vm1014 = vcmp.eq.f32.partialorder %v1008, %v394
    %vm1015 = vcmp.eq.f32.partialorder %v1008, %v395
    %vm1016 = vcmp.eq.f32.partialorder %v1008, %v396
    %vm1017 = vcmp.gt.s32.totalorder %v29, 19
    %vm1018 = vcmp.gt.s32.totalorder %v30, 19
    %vm1019 = vcmp.gt.s32.totalorder %v31, 19
    %vm1020 = vcmp.gt.s32.totalorder %v32, 19
    %vm1021 = vmand %vm1013, %vm1017
    %vm1022 = vmand %vm1014, %vm1018
    %vm1023 = vmand %vm1015, %vm1019
    %vm1024 = vmand %vm1016, %vm1020
    %vm1025 = vmor %vm1009, %vm1021
    %vm1026 = vmor %vm1010, %vm1022
    %vm1027 = vmor %vm1011, %vm1023
    %vm1028 = vmor %vm1012, %vm1024
    %v1029 = vsel %vm1025, 1.0, 0.0
    %v1030 = vsel %vm1026, 1.0, 0.0
    %v1031 = vsel %vm1027, 1.0, 0.0
    %v1032 = vsel %vm1028, 1.0, 0.0
    %v1033 = vadd.f32 %v1001, %v1029
    %v1034 = vadd.f32 %v1002, %v1030
    %v1035 = vadd.f32 %v1003, %v1031
    %v1036 = vadd.f32 %v1004, %v1032
    %v1037 = vlaneseq
    %v1038 = vshrl.u32 %v1037, 7
    %v1039 = vsub.s32 4, %v1038
    %v1040 = vrot.slane %v395, %v1039
    %vm1041 = vcmp.lt.f32.partialorder %v1040, %v393
    %vm1042 = vcmp.lt.f32.partialorder %v1040, %v394
    %vm1043 = vcmp.lt.f32.partialorder %v1040, %v395
    %vm1044 = vcmp.lt.f32.partialorder %v1040, %v396
    %vm1045 = vcmp.eq.f32.partialorder %v1040, %v393
    %vm1046 = vcmp.eq.f32.partialorder %v1040, %v394
    %vm1047 = vcmp.eq.f32.partialorder %v1040, %v395
    %vm1048 = vcmp.eq.f32.partialorder %v1040, %v396
    %vm1049 = vcmp.gt.s32.totalorder %v29, 20
    %vm1050 = vcmp.gt.s32.totalorder %v30, 20
    %vm1051 = vcmp.gt.s32.totalorder %v31, 20
    %vm1052 = vcmp.gt.s32.totalorder %v32, 20
    %vm1053 = vmand %vm1045, %vm1049
    %vm1054 = vmand %vm1046, %vm1050
    %vm1055 = vmand %vm1047, %vm1051
    %vm1056 = vmand %vm1048, %vm1052
    %vm1057 = vmor %vm1041, %vm1053
    %vm1058 = vmor %vm1042, %vm1054
    %vm1059 = vmor %vm1043, %vm1055
    %vm1060 = vmor %vm1044, %vm1056
    %v1061 = vsel %vm1057, 1.0, 0.0
    %v1062 = vsel %vm1058, 1.0, 0.0
    %v1063 = vsel %vm1059, 1.0, 0.0
    %v1064 = vsel %vm1060, 1.0, 0.0
    %v1065 = vadd.f32 %v1033, %v1061
    %v1066 = vadd.f32 %v1034, %v1062
    %v1067 = vadd.f32 %v1035, %v1063
    %v1068 = vadd.f32 %v1036, %v1064
    %v1069 = vlaneseq
    %v1070 = vshrl.u32 %v1069, 7
    %v1071 = vsub.s32 5, %v1070
    %v1072 = vrot.slane %v395, %v1071
    %vm1073 = vcmp.lt.f32.partialorder %v1072, %v393
    %vm1074 = vcmp.lt.f32.partialorder %v1072, %v394
    %vm1075 = vcmp.lt.f32.partialorder %v1072, %v395
    %vm1076 = vcmp.lt.f32.partialorder %v1072, %v396
    %vm1077 = vcmp.eq.f32.partialorder %v1072, %v393
    %vm1078 = vcmp.eq.f32.partialorder %v1072, %v394
    %vm1079 = vcmp.eq.f32.partialorder %v1072, %v395
    %vm1080 = vcmp.eq.f32.partialorder %v1072, %v396
    %vm1081 = vcmp.gt.s32.totalorder %v29, 21
    %vm1082 = vcmp.gt.s32.totalorder %v30, 21
    %vm1083 = vcmp.gt.s32.totalorder %v31, 21
    %vm1084 = vcmp.gt.s32.totalorder %v32, 21
    %vm1085 = vmand %vm1077, %vm1081
    %vm1086 = vmand %vm1078, %vm1082
    %vm1087 = vmand %vm1079, %vm1083
    %vm1088 = vmand %vm1080, %vm1084
    %vm1089 = vmor %vm1073, %vm1085
    %vm1090 = vmor %vm1074, %vm1086
    %vm1091 = vmor %vm1075, %vm1087
    %vm1092 = vmor %vm1076, %vm1088
    %v1093 = vsel %vm1089, 1.0, 0.0
    %v1094 = vsel %vm1090, 1.0, 0.0
    %v1095 = vsel %vm1091, 1.0, 0.0
    %v1096 = vsel %vm1092, 1.0, 0.0
    %v1097 = vadd.f32 %v1065, %v1093
    %v1098 = vadd.f32 %v1066, %v1094
    %v1099 = vadd.f32 %v1067, %v1095
    %v1100 = vadd.f32 %v1068, %v1096
    %v1101 = vlaneseq
    %v1102 = vshrl.u32 %v1101, 7
    %v1103 = vsub.s32 6, %v1102
    %v1104 = vrot.slane %v395, %v1103
    %vm1105 = vcmp.lt.f32.partialorder %v1104, %v393
    %vm1106 = vcmp.lt.f32.partialorder %v1104, %v394
    %vm1107 = vcmp.lt.f32.partialorder %v1104, %v395
    %vm1108 = vcmp.lt.f32.partialorder %v1104, %v396
    %vm1109 = vcmp.eq.f32.partialorder %v1104, %v393
    %vm1110 = vcmp.eq.f32.partialorder %v1104, %v394
    %vm1111 = vcmp.eq.f32.partialorder %v1104, %v395
    %vm1112 = vcmp.eq.f32.partialorder %v1104, %v396
    %vm1113 = vcmp.gt.s32.totalorder %v29, 22
    %vm1114 = vcmp.gt.s32.totalorder %v30, 22
    %vm1115 = vcmp.gt.s32.totalorder %v31, 22
    %vm1116 = vcmp.gt.s32.totalorder %v32, 22
    %vm1117 = vmand %vm1109, %vm1113
    %vm1118 = vmand %vm1110, %vm1114
    %vm1119 = vmand %vm1111, %vm1115
    %vm1120 = vmand %vm1112, %vm1116
    %vm1121 = vmor %vm1105, %vm1117
    %vm1122 = vmor %vm1106, %vm1118
    %vm1123 = vmor %vm1107, %vm1119
    %vm1124 = vmor %vm1108, %vm1120
    %v1125 = vsel %vm1121, 1.0, 0.0
    %v1126 = vsel %vm1122, 1.0, 0.0
    %v1127 = vsel %vm1123, 1.0, 0.0
    %v1128 = vsel %vm1124, 1.0, 0.0
    %v1129 = vadd.f32 %v1097, %v1125
    %v1130 = vadd.f32 %v1098, %v1126
    %v1131 = vadd.f32 %v1099, %v1127
    %v1132 = vadd.f32 %v1100, %v1128
    %v1133 = vlaneseq
    %v1134 = vshrl.u32 %v1133, 7
    %v1135 = vsub.s32 7, %v1134
    %v1136 = vrot.slane %v395, %v1135
    %vm1137 = vcmp.lt.f32.partialorder %v1136, %v393
    %vm1138 = vcmp.lt.f32.partialorder %v1136, %v394
    %vm1139 = vcmp.lt.f32.partialorder %v1136, %v395
    %vm1140 = vcmp.lt.f32.partialorder %v1136, %v396
    %vm1141 = vcmp.eq.f32.partialorder %v1136, %v393
    %vm1142 = vcmp.eq.f32.partialorder %v1136, %v394
    %vm1143 = vcmp.eq.f32.partialorder %v1136, %v395
    %vm1144 = vcmp.eq.f32.partialorder %v1136, %v396
    %vm1145 = vcmp.gt.s32.totalorder %v29, 23
    %vm1146 = vcmp.gt.s32.totalorder %v30, 23
    %vm1147 = vcmp.gt.s32.totalorder %v31, 23
    %vm1148 = vcmp.gt.s32.totalorder %v32, 23
    %vm1149 = vmand %vm1141, %vm1145
    %vm1150 = vmand %vm1142, %vm1146
    %vm1151 = vmand %vm1143, %vm1147
    %vm1152 = vmand %vm1144, %vm1148
    %vm1153 = vmor %vm1137, %vm1149
    %vm1154 = vmor %vm1138, %vm1150
    %vm1155 = vmor %vm1139, %vm1151
    %vm1156 = vmor %vm1140, %vm1152
    %v1157 = vsel %vm1153, 1.0, 0.0
    %v1158 = vsel %vm1154, 1.0, 0.0
    %v1159 = vsel %vm1155, 1.0, 0.0
    %v1160 = vsel %vm1156, 1.0, 0.0
    %v1161 = vadd.f32 %v1129, %v1157
    %v1162 = vadd.f32 %v1130, %v1158
    %v1163 = vadd.f32 %v1131, %v1159
    %v1164 = vadd.f32 %v1132, %v1160
    %v1165 = vlaneseq
    %v1166 = vshrl.u32 %v1165, 7
    %v1167 = vsub.s32 0, %v1166
    %v1168 = vrot.slane %v396, %v1167
    %vm1169 = vcmp.lt.f32.partialorder %v1168, %v393
    %vm1170 = vcmp.lt.f32.partialorder %v1168, %v394
    %vm1171 = vcmp.lt.f32.partialorder %v1168, %v395
    %vm1172 = vcmp.lt.f32.partialorder %v1168, %v396
    %vm1173 = vcmp.eq.f32.partialorder %v1168, %v393
    %vm1174 = vcmp.eq.f32.partialorder %v1168, %v394
    %vm1175 = vcmp.eq.f32.partialorder %v1168, %v395
    %vm1176 = vcmp.eq.f32.partialorder %v1168, %v396
    %vm1177 = vcmp.gt.s32.totalorder %v29, 24
    %vm1178 = vcmp.gt.s32.totalorder %v30, 24
    %vm1179 = vcmp.gt.s32.totalorder %v31, 24
    %vm1180 = vcmp.gt.s32.totalorder %v32, 24
    %vm1181 = vmand %vm1173, %vm1177
    %vm1182 = vmand %vm1174, %vm1178
    %vm1183 = vmand %vm1175, %vm1179
    %vm1184 = vmand %vm1176, %vm1180
    %vm1185 = vmor %vm1169, %vm1181
    %vm1186 = vmor %vm1170, %vm1182
    %vm1187 = vmor %vm1171, %vm1183
    %vm1188 = vmor %vm1172, %vm1184
    %v1189 = vsel %vm1185, 1.0, 0.0
    %v1190 = vsel %vm1186, 1.0, 0.0
    %v1191 = vsel %vm1187, 1.0, 0.0
    %v1192 = vsel %vm1188, 1.0, 0.0
    %v1193 = vadd.f32 %v1161, %v1189
    %v1194 = vadd.f32 %v1162, %v1190
    %v1195 = vadd.f32 %v1163, %v1191
    %v1196 = vadd.f32 %v1164, %v1192
    %v1197 = vlaneseq
    %v1198 = vshrl.u32 %v1197, 7
    %v1199 = vsub.s32 1, %v1198
    %v1200 = vrot.slane %v396, %v1199
    %vm1201 = vcmp.lt.f32.partialorder %v1200, %v393
    %vm1202 = vcmp.lt.f32.partialorder %v1200, %v394
    %vm1203 = vcmp.lt.f32.partialorder %v1200, %v395
    %vm1204 = vcmp.lt.f32.partialorder %v1200, %v396
    %vm1205 = vcmp.eq.f32.partialorder %v1200, %v393
    %vm1206 = vcmp.eq.f32.partialorder %v1200, %v394
    %vm1207 = vcmp.eq.f32.partialorder %v1200, %v395
    %vm1208 = vcmp.eq.f32.partialorder %v1200, %v396
    %vm1209 = vcmp.gt.s32.totalorder %v29, 25
    %vm1210 = vcmp.gt.s32.totalorder %v30, 25
    %vm1211 = vcmp.gt.s32.totalorder %v31, 25
    %vm1212 = vcmp.gt.s32.totalorder %v32, 25
    %vm1213 = vmand %vm1205, %vm1209
    %vm1214 = vmand %vm1206, %vm1210
    %vm1215 = vmand %vm1207, %vm1211
    %vm1216 = vmand %vm1208, %vm1212
    %vm1217 = vmor %vm1201, %vm1213
    %vm1218 = vmor %vm1202, %vm1214
    %vm1219 = vmor %vm1203, %vm1215
    %vm1220 = vmor %vm1204, %vm1216
    %v1221 = vsel %vm1217, 1.0, 0.0
    %v1222 = vsel %vm1218, 1.0, 0.0
    %v1223 = vsel %vm1219, 1.0, 0.0
    %v1224 = vsel %vm1220, 1.0, 0.0
    %v1225 = vadd.f32 %v1193, %v1221
    %v1226 = vadd.f32 %v1194, %v1222
    %v1227 = vadd.f32 %v1195, %v1223
    %v1228 = vadd.f32 %v1196, %v1224
    %v1229 = vlaneseq
    %v1230 = vshrl.u32 %v1229, 7
    %v1231 = vsub.s32 2, %v1230
    %v1232 = vrot.slane %v396, %v1231
    %vm1233 = vcmp.lt.f32.partialorder %v1232, %v393
    %vm1234 = vcmp.lt.f32.partialorder %v1232, %v394
    %vm1235 = vcmp.lt.f32.partialorder %v1232, %v395
    %vm1236 = vcmp.lt.f32.partialorder %v1232, %v396
    %vm1237 = vcmp.eq.f32.partialorder %v1232, %v393
    %vm1238 = vcmp.eq.f32.partialorder %v1232, %v394
    %vm1239 = vcmp.eq.f32.partialorder %v1232, %v395
    %vm1240 = vcmp.eq.f32.partialorder %v1232, %v396
    %vm1241 = vcmp.gt.s32.totalorder %v29, 26
    %vm1242 = vcmp.gt.s32.totalorder %v30, 26
    %vm1243 = vcmp.gt.s32.totalorder %v31, 26
    %vm1244 = vcmp.gt.s32.totalorder %v32, 26
    %vm1245 = vmand %vm1237, %vm1241
    %vm1246 = vmand %vm1238, %vm1242
    %vm1247 = vmand %vm1239, %vm1243
    %vm1248 = vmand %vm1240, %vm1244
    %vm1249 = vmor %vm1233, %vm1245
    %vm1250 = vmor %vm1234, %vm1246
    %vm1251 = vmor %vm1235, %vm1247
    %vm1252 = vmor %vm1236, %vm1248
    %v1253 = vsel %vm1249, 1.0, 0.0
    %v1254 = vsel %vm1250, 1.0, 0.0
    %v1255 = vsel %vm1251, 1.0, 0.0
    %v1256 = vsel %vm1252, 1.0, 0.0
    %v1257 = vadd.f32 %v1225, %v1253
    %v1258 = vadd.f32 %v1226, %v1254
    %v1259 = vadd.f32 %v1227, %v1255
    %v1260 = vadd.f32 %v1228, %v1256
    %v1261 = vlaneseq
    %v1262 = vshrl.u32 %v1261, 7
    %v1263 = vsub.s32 3, %v1262
    %v1264 = vrot.slane %v396, %v1263
    %vm1265 = vcmp.lt.f32.partialorder %v1264, %v393
    %vm1266 = vcmp.lt.f32.partialorder %v1264, %v394
    %vm1267 = vcmp.lt.f32.partialorder %v1264, %v395
    %vm1268 = vcmp.lt.f32.partialorder %v1264, %v396
    %vm1269 = vcmp.eq.f32.partialorder %v1264, %v393
    %vm1270 = vcmp.eq.f32.partialorder %v1264, %v394
    %vm1271 = vcmp.eq.f32.partialorder %v1264, %v395
    %vm1272 = vcmp.eq.f32.partialorder %v1264, %v396
    %vm1273 = vcmp.gt.s32.totalorder %v29, 27
    %vm1274 = vcmp.gt.s32.totalorder %v30, 27
    %vm1275 = vcmp.gt.s32.totalorder %v31, 27
    %vm1276 = vcmp.gt.s32.totalorder %v32, 27
    %vm1277 = vmand %vm1269, %vm1273
    %vm1278 = vmand %vm1270, %vm1274
    %vm1279 = vmand %vm1271, %vm1275
    %vm1280 = vmand %vm1272, %vm1276
    %vm1281 = vmor %vm1265, %vm1277
    %vm1282 = vmor %vm1266, %vm1278
    %vm1283 = vmor %vm1267, %vm1279
    %vm1284 = vmor %vm1268, %vm1280
    %v1285 = vsel %vm1281, 1.0, 0.0
    %v1286 = vsel %vm1282, 1.0, 0.0
    %v1287 = vsel %vm1283, 1.0, 0.0
    %v1288 = vsel %vm1284, 1.0, 0.0
    %v1289 = vadd.f32 %v1257, %v1285
    %v1290 = vadd.f32 %v1258, %v1286
    %v1291 = vadd.f32 %v1259, %v1287
    %v1292 = vadd.f32 %v1260, %v1288
    %v1293 = vlaneseq
    %v1294 = vshrl.u32 %v1293, 7
    %v1295 = vsub.s32 4, %v1294
    %v1296 = vrot.slane %v396, %v1295
    %vm1297 = vcmp.lt.f32.partialorder %v1296, %v393
    %vm1298 = vcmp.lt.f32.partialorder %v1296, %v394
    %vm1299 = vcmp.lt.f32.partialorder %v1296, %v395
    %vm1300 = vcmp.lt.f32.partialorder %v1296, %v396
    %vm1301 = vcmp.eq.f32.partialorder %v1296, %v393
    %vm1302 = vcmp.eq.f32.partialorder %v1296, %v394
    %vm1303 = vcmp.eq.f32.partialorder %v1296, %v395
    %vm1304 = vcmp.eq.f32.partialorder %v1296, %v396
    %vm1305 = vcmp.gt.s32.totalorder %v29, 28
    %vm1306 = vcmp.gt.s32.totalorder %v30, 28
    %vm1307 = vcmp.gt.s32.totalorder %v31, 28
    %vm1308 = vcmp.gt.s32.totalorder %v32, 28
    %vm1309 = vmand %vm1301, %vm1305
    %vm1310 = vmand %vm1302, %vm1306
    %vm1311 = vmand %vm1303, %vm1307
    %vm1312 = vmand %vm1304, %vm1308
    %vm1313 = vmor %vm1297, %vm1309
    %vm1314 = vmor %vm1298, %vm1310
    %vm1315 = vmor %vm1299, %vm1311
    %vm1316 = vmor %vm1300, %vm1312
    %v1317 = vsel %vm1313, 1.0, 0.0
    %v1318 = vsel %vm1314, 1.0, 0.0
    %v1319 = vsel %vm1315, 1.0, 0.0
    %v1320 = vsel %vm1316, 1.0, 0.0
    %v1321 = vadd.f32 %v1289, %v1317
    %v1322 = vadd.f32 %v1290, %v1318
    %v1323 = vadd.f32 %v1291, %v1319
    %v1324 = vadd.f32 %v1292, %v1320
    %v1325 = vlaneseq
    %v1326 = vshrl.u32 %v1325, 7
    %v1327 = vsub.s32 5, %v1326
    %v1328 = vrot.slane %v396, %v1327
    %vm1329 = vcmp.lt.f32.partialorder %v1328, %v393
    %vm1330 = vcmp.lt.f32.partialorder %v1328, %v394
    %vm1331 = vcmp.lt.f32.partialorder %v1328, %v395
    %vm1332 = vcmp.lt.f32.partialorder %v1328, %v396
    %vm1333 = vcmp.eq.f32.partialorder %v1328, %v393
    %vm1334 = vcmp.eq.f32.partialorder %v1328, %v394
    %vm1335 = vcmp.eq.f32.partialorder %v1328, %v395
    %vm1336 = vcmp.eq.f32.partialorder %v1328, %v396
    %vm1337 = vcmp.gt.s32.totalorder %v29, 29
    %vm1338 = vcmp.gt.s32.totalorder %v30, 29
    %vm1339 = vcmp.gt.s32.totalorder %v31, 29
    %vm1340 = vcmp.gt.s32.totalorder %v32, 29
    %vm1341 = vmand %vm1333, %vm1337
    %vm1342 = vmand %vm1334, %vm1338
    %vm1343 = vmand %vm1335, %vm1339
    %vm1344 = vmand %vm1336, %vm1340
    %vm1345 = vmor %vm1329, %vm1341
    %vm1346 = vmor %vm1330, %vm1342
    %vm1347 = vmor %vm1331, %vm1343
    %vm1348 = vmor %vm1332, %vm1344
    %v1349 = vsel %vm1345, 1.0, 0.0
    %v1350 = vsel %vm1346, 1.0, 0.0
    %v1351 = vsel %vm1347, 1.0, 0.0
    %v1352 = vsel %vm1348, 1.0, 0.0
    %v1353 = vadd.f32 %v1321, %v1349
    %v1354 = vadd.f32 %v1322, %v1350
    %v1355 = vadd.f32 %v1323, %v1351
    %v1356 = vadd.f32 %v1324, %v1352
    %v1357 = vlaneseq
    %v1358 = vshrl.u32 %v1357, 7
    %v1359 = vsub.s32 6, %v1358
    %v1360 = vrot.slane %v396, %v1359
    %vm1361 = vcmp.lt.f32.partialorder %v1360, %v393
    %vm1362 = vcmp.lt.f32.partialorder %v1360, %v394
    %vm1363 = vcmp.lt.f32.partialorder %v1360, %v395
    %vm1364 = vcmp.lt.f32.partialorder %v1360, %v396
    %vm1365 = vcmp.eq.f32.partialorder %v1360, %v393
    %vm1366 = vcmp.eq.f32.partialorder %v1360, %v394
    %vm1367 = vcmp.eq.f32.partialorder %v1360, %v395
    %vm1368 = vcmp.eq.f32.partialorder %v1360, %v396
    %vm1369 = vcmp.gt.s32.totalorder %v29, 30
    %vm1370 = vcmp.gt.s32.totalorder %v30, 30
    %vm1371 = vcmp.gt.s32.totalorder %v31, 30
    %vm1372 = vcmp.gt.s32.totalorder %v32, 30
    %vm1373 = vmand %vm1365, %vm1369
    %vm1374 = vmand %vm1366, %vm1370
    %vm1375 = vmand %vm1367, %vm1371
    %vm1376 = vmand %vm1368, %vm1372
    %vm1377 = vmor %vm1361, %vm1373
    %vm1378 = vmor %vm1362, %vm1374
    %vm1379 = vmor %vm1363, %vm1375
    %vm1380 = vmor %vm1364, %vm1376
    %v1381 = vsel %vm1377, 1.0, 0.0
    %v1382 = vsel %vm1378, 1.0, 0.0
    %v1383 = vsel %vm1379, 1.0, 0.0
    %v1384 = vsel %vm1380, 1.0, 0.0
    %v1385 = vadd.f32 %v1353, %v1381
    %v1386 = vadd.f32 %v1354, %v1382
    %v1387 = vadd.f32 %v1355, %v1383
    %v1388 = vadd.f32 %v1356, %v1384
    %v1389 = vlaneseq
    %v1390 = vshrl.u32 %v1389, 7
    %v1391 = vsub.s32 7, %v1390
    %v1392 = vrot.slane %v396, %v1391
    %vm1393 = vcmp.lt.f32.partialorder %v1392, %v393
    %vm1394 = vcmp.lt.f32.partialorder %v1392, %v394
    %vm1395 = vcmp.lt.f32.partialorder %v1392, %v395
    %vm1396 = vcmp.lt.f32.partialorder %v1392, %v396
    %vm1397 = vcmp.eq.f32.partialorder %v1392, %v393
    %vm1398 = vcmp.eq.f32.partialorder %v1392, %v394
    %vm1399 = vcmp.eq.f32.partialorder %v1392, %v395
    %vm1400 = vcmp.eq.f32.partialorder %v1392, %v396
    %vm1401 = vcmp.gt.s32.totalorder %v29, 31
    %vm1402 = vcmp.gt.s32.totalorder %v30, 31
    %vm1403 = vcmp.gt.s32.totalorder %v31, 31
    %vm1404 = vcmp.gt.s32.totalorder %v32, 31
    %vm1405 = vmand %vm1397, %vm1401
    %vm1406 = vmand %vm1398, %vm1402
    %vm1407 = vmand %vm1399, %vm1403
    %vm1408 = vmand %vm1400, %vm1404
    %vm1409 = vmor %vm1393, %vm1405
    %vm1410 = vmor %vm1394, %vm1406
    %vm1411 = vmor %vm1395, %vm1407
    %vm1412 = vmor %vm1396, %vm1408
    %v1413 = vsel %vm1409, 1.0, 0.0
    %v1414 = vsel %vm1410, 1.0, 0.0
    %v1415 = vsel %vm1411, 1.0, 0.0
    %v1416 = vsel %vm1412, 1.0, 0.0
    %v1417 = vadd.f32 %v1385, %v1413
    %v1418 = vadd.f32 %v1386, %v1414
    %v1419 = vadd.f32 %v1387, %v1415
    %v1420 = vadd.f32 %v1388, %v1416
    %vm1421 = vcmp.lt.f32.partialorder %v1417, 10.0
    %vm1422 = vcmp.lt.f32.partialorder %v1418, 10.0
    %vm1423 = vcmp.lt.f32.partialorder %v1419, 10.0
    %vm1424 = vcmp.lt.f32.partialorder %v1420, 10.0
    %v1425 = vsel %vm1421, %v338, 0.0
    %v1426 = vsel %vm1422, %v340, 0.0
    %v1427 = vsel %vm1423, %v342, 0.0
    %v1428 = vsel %vm1424, %v344, 0.0
    %v1429 = vsel %vm1421, 0.0, -1e+30
    %v1430 = vsel %vm1422, 0.0, -1e+30
    %v1431 = vsel %vm1423, 0.0, -1e+30
    %v1432 = vsel %vm1424, 0.0, -1e+30
    %s1433 = sld [smem:[#allocation2 + $0x12]]
    %v1434 = vstv %s1433
    %v1435 = vmul.f32 %v80, %v1434
    %s1436 = sld [smem:[#allocation2 + $0x13]]
    %v1437 = vstv %s1436
    %v1438 = vmul.f32 %v113, %v1437
    %v1439 = vadd.f32 %v1435, %v1438
    %s1440 = sld [smem:[#allocation2 + $0x14]]
    %v1441 = vstv %s1440
    %v1442 = vmul.f32 %v146, %v1441
    %v1443 = vadd.f32 %v1439, %v1442
    %s1444 = sld [smem:[#allocation2 + $0x6]]
    %v1445 = vstv %s1444
    %v1446 = vmul.f32 %v24, %v1445
    %v1447 = vmul.f32 %v25, %v1445
    %v1448 = vmul.f32 %v26, %v1445
    %v1449 = vmul.f32 %v27, %v1445
    %s1450 = sld [smem:[#allocation2 + $0x9]]
    %v1451 = vstv %s1450
    %v1452 = vmul.f32 %v24, %v1451
    %v1453 = vmul.f32 %v25, %v1451
    %v1454 = vmul.f32 %v26, %v1451
    %v1455 = vmul.f32 %v27, %v1451
    %1460 = vrot.lane.b32.xlu0 %v1452, 127
    %v1461 = vpop.permute.xlu0 %1460
    %1462 = vrot.lane.b32.xlu0 %v1453, 127
    %v1463 = vpop.permute.xlu0 %1462
    %1464 = vrot.lane.b32.xlu0 %v1454, 127
    %v1465 = vpop.permute.xlu0 %1464
    %1466 = vrot.lane.b32.xlu0 %v1455, 127
    %v1467 = vpop.permute.xlu0 %1466
    %v1472 = vadd.f32 %v1446, %v1461
    %v1473 = vadd.f32 %v1447, %v1463
    %v1474 = vadd.f32 %v1448, %v1465
    %v1475 = vadd.f32 %v1449, %v1467
    %s1476 = sld [smem:[#allocation2 + $0xc]]
    %v1477 = vstv %s1476
    %v1478 = vmul.f32 %v24, %v1477
    %v1479 = vmul.f32 %v25, %v1477
    %v1480 = vmul.f32 %v26, %v1477
    %v1481 = vmul.f32 %v27, %v1477
    %1486 = vrot.lane.b32.xlu0 %v1478, 126
    %v1487 = vpop.permute.xlu0 %1486
    %1488 = vrot.lane.b32.xlu0 %v1479, 126
    %v1489 = vpop.permute.xlu0 %1488
    %1490 = vrot.lane.b32.xlu0 %v1480, 126
    %v1491 = vpop.permute.xlu0 %1490
    %1492 = vrot.lane.b32.xlu0 %v1481, 126
    %v1493 = vpop.permute.xlu0 %1492
    %v1498 = vadd.f32 %v1472, %v1487
    %v1499 = vadd.f32 %v1473, %v1489
    %v1500 = vadd.f32 %v1474, %v1491
    %v1501 = vadd.f32 %v1475, %v1493
    %s1502 = sld [smem:[#allocation2 + $0xf]]
    %v1503 = vstv %s1502
    %v1504 = vadd.f32 %v1498, %v1503
    %v1505 = vadd.f32 %v1499, %v1503
    %v1506 = vadd.f32 %v1500, %v1503
    %v1507 = vadd.f32 %v1501, %v1503
    %1509 = vset.pattern.permute.xlu0 0
    %1510 = vperm.xlu0 %1509, %v1504
    %v1511 = vpop.permute.xlu0 %1510
    %1514 = vset.pattern.permute.xlu0 0
    %1515 = vperm.xlu0 %1514, %v1505
    %v1516 = vpop.permute.xlu0 %1515
    %1519 = vset.pattern.permute.xlu0 0
    %1520 = vperm.xlu0 %1519, %v1506
    %v1521 = vpop.permute.xlu0 %1520
    %1524 = vset.pattern.permute.xlu0 0
    %1525 = vperm.xlu0 %1524, %v1507
    %v1526 = vpop.permute.xlu0 %1525
    %v1528 = vmul.f32 %v1425, %v1511
    %v1529 = vmul.f32 %v1426, %v1516
    %v1530 = vmul.f32 %v1427, %v1521
    %v1531 = vmul.f32 %v1428, %v1526
    %v1532 = vsel %vm67, %v1528, 0.0
    %v1533 = vsel %vm67, %v1529, 0.0
    %v1534 = vadd.f32 %v1532, %v1533
    %v1535 = vsel %vm67, %v1530, 0.0
    %v1536 = vadd.f32 %v1534, %v1535
    %v1537 = vsel %vm67, %v1531, 0.0
    %v1538 = vadd.f32 %v1536, %v1537
    %v1539 = vrot.slane %v1538, 4
    %v1540 = vadd.f32 %v1538, %v1539
    %v1541 = vrot.slane %v1540, 2
    %v1542 = vadd.f32 %v1540, %v1541
    %v1543 = vrot.slane %v1542, 1
    %v1544 = vadd.f32 %v1542, %v1543
    %v1545 = vmul.f32 %v1544, 0.1
    %v1546 = vmul.f32 %v338, %v1511
    %v1547 = vmul.f32 %v340, %v1516
    %v1548 = vmul.f32 %v342, %v1521
    %v1549 = vmul.f32 %v344, %v1526
    %v1550 = vadd.f32 %v1546, %v1429
    %v1551 = vadd.f32 %v1547, %v1430
    %v1552 = vadd.f32 %v1548, %v1431
    %v1553 = vadd.f32 %v1549, %v1432
    %v1554 = vsel %vm67, %v1550, -inf
    %v1555 = vsel %vm67, %v1551, -inf
    %v1556 = vsel %vm67, %v1552, -inf
    %v1557 = vsel %vm67, %v1553, -inf
    %v1558 = vmax.f32 %v1554, %v1555
    %v1559 = vmax.f32 %v1556, %v1557
    %v1560 = vmax.f32 %v1558, %v1559
    %v1561 = vrot.slane %v1560, 4
    %v1562 = vmax.f32 %v1560, %v1561
    %v1563 = vrot.slane %v1562, 2
    %v1564 = vmax.f32 %v1562, %v1563
    %v1565 = vrot.slane %v1564, 1
    %v1566 = vmax.f32 %v1564, %v1565
    %s1567 = sld [smem:[#allocation2 + $0x15]]
    %v1568 = vstv %s1567
    %v1569 = vmul.f32 %v1545, %v1568
    %v1570 = vadd.f32 %v1443, %v1569
    %s1571 = sld [smem:[#allocation2 + $0x18]]
    %v1572 = vstv %s1571
    %v1573 = vmul.f32 %v1566, %v1572
    %v1574 = vadd.f32 %v1570, %v1573
    %s1575 = sld [smem:[#allocation2 + $0x7]]
    %v1576 = vstv %s1575
    %v1577 = vmul.f32 %v24, %v1576
    %v1578 = vmul.f32 %v25, %v1576
    %v1579 = vmul.f32 %v26, %v1576
    %v1580 = vmul.f32 %v27, %v1576
    %s1581 = sld [smem:[#allocation2 + $0xa]]
    %v1582 = vstv %s1581
    %v1583 = vmul.f32 %v24, %v1582
    %v1584 = vmul.f32 %v25, %v1582
    %v1585 = vmul.f32 %v26, %v1582
    %v1586 = vmul.f32 %v27, %v1582
    %1591 = vrot.lane.b32.xlu0 %v1583, 127
    %v1592 = vpop.permute.xlu0 %1591
    %1593 = vrot.lane.b32.xlu0 %v1584, 127
    %v1594 = vpop.permute.xlu0 %1593
    %1595 = vrot.lane.b32.xlu0 %v1585, 127
    %v1596 = vpop.permute.xlu0 %1595
    %1597 = vrot.lane.b32.xlu0 %v1586, 127
    %v1598 = vpop.permute.xlu0 %1597
    %v1603 = vadd.f32 %v1577, %v1592
    %v1604 = vadd.f32 %v1578, %v1594
    %v1605 = vadd.f32 %v1579, %v1596
    %v1606 = vadd.f32 %v1580, %v1598
    %s1607 = sld [smem:[#allocation2 + $0xd]]
    %v1608 = vstv %s1607
    %v1609 = vmul.f32 %v24, %v1608
    %v1610 = vmul.f32 %v25, %v1608
    %v1611 = vmul.f32 %v26, %v1608
    %v1612 = vmul.f32 %v27, %v1608
    %1617 = vrot.lane.b32.xlu0 %v1609, 126
    %v1618 = vpop.permute.xlu0 %1617
    %1619 = vrot.lane.b32.xlu0 %v1610, 126
    %v1620 = vpop.permute.xlu0 %1619
    %1621 = vrot.lane.b32.xlu0 %v1611, 126
    %v1622 = vpop.permute.xlu0 %1621
    %1623 = vrot.lane.b32.xlu0 %v1612, 126
    %v1624 = vpop.permute.xlu0 %1623
    %v1629 = vadd.f32 %v1603, %v1618
    %v1630 = vadd.f32 %v1604, %v1620
    %v1631 = vadd.f32 %v1605, %v1622
    %v1632 = vadd.f32 %v1606, %v1624
    %s1633 = sld [smem:[#allocation2 + $0x10]]
    %v1634 = vstv %s1633
    %v1635 = vadd.f32 %v1629, %v1634
    %v1636 = vadd.f32 %v1630, %v1634
    %v1637 = vadd.f32 %v1631, %v1634
    %v1638 = vadd.f32 %v1632, %v1634
    %1640 = vset.pattern.permute.xlu0 0
    %1641 = vperm.xlu0 %1640, %v1635
    %v1642 = vpop.permute.xlu0 %1641
    %1645 = vset.pattern.permute.xlu0 0
    %1646 = vperm.xlu0 %1645, %v1636
    %v1647 = vpop.permute.xlu0 %1646
    %1650 = vset.pattern.permute.xlu0 0
    %1651 = vperm.xlu0 %1650, %v1637
    %v1652 = vpop.permute.xlu0 %1651
    %1655 = vset.pattern.permute.xlu0 0
    %1656 = vperm.xlu0 %1655, %v1638
    %v1657 = vpop.permute.xlu0 %1656
    %v1659 = vmul.f32 %v1425, %v1642
    %v1660 = vmul.f32 %v1426, %v1647
    %v1661 = vmul.f32 %v1427, %v1652
    %v1662 = vmul.f32 %v1428, %v1657
    %v1663 = vsel %vm67, %v1659, 0.0
    %v1664 = vsel %vm67, %v1660, 0.0
    %v1665 = vadd.f32 %v1663, %v1664
    %v1666 = vsel %vm67, %v1661, 0.0
    %v1667 = vadd.f32 %v1665, %v1666
    %v1668 = vsel %vm67, %v1662, 0.0
    %v1669 = vadd.f32 %v1667, %v1668
    %v1670 = vrot.slane %v1669, 4
    %v1671 = vadd.f32 %v1669, %v1670
    %v1672 = vrot.slane %v1671, 2
    %v1673 = vadd.f32 %v1671, %v1672
    %v1674 = vrot.slane %v1673, 1
    %v1675 = vadd.f32 %v1673, %v1674
    %v1676 = vmul.f32 %v1675, 0.1
    %v1677 = vmul.f32 %v338, %v1642
    %v1678 = vmul.f32 %v340, %v1647
    %v1679 = vmul.f32 %v342, %v1652
    %v1680 = vmul.f32 %v344, %v1657
    %v1681 = vadd.f32 %v1677, %v1429
    %v1682 = vadd.f32 %v1678, %v1430
    %v1683 = vadd.f32 %v1679, %v1431
    %v1684 = vadd.f32 %v1680, %v1432
    %v1685 = vsel %vm67, %v1681, -inf
    %v1686 = vsel %vm67, %v1682, -inf
    %v1687 = vsel %vm67, %v1683, -inf
    %v1688 = vsel %vm67, %v1684, -inf
    %v1689 = vmax.f32 %v1685, %v1686
    %v1690 = vmax.f32 %v1687, %v1688
    %v1691 = vmax.f32 %v1689, %v1690
    %v1692 = vrot.slane %v1691, 4
    %v1693 = vmax.f32 %v1691, %v1692
    %v1694 = vrot.slane %v1693, 2
    %v1695 = vmax.f32 %v1693, %v1694
    %v1696 = vrot.slane %v1695, 1
    %v1697 = vmax.f32 %v1695, %v1696
    %s1698 = sld [smem:[#allocation2 + $0x16]]
    %v1699 = vstv %s1698
    %v1700 = vmul.f32 %v1676, %v1699
    %v1701 = vadd.f32 %v1574, %v1700
    %s1702 = sld [smem:[#allocation2 + $0x19]]
    %v1703 = vstv %s1702
    %v1704 = vmul.f32 %v1697, %v1703
    %v1705 = vadd.f32 %v1701, %v1704
    %s1706 = sld [smem:[#allocation2 + $0x8]]
    %v1707 = vstv %s1706
    %v1708 = vmul.f32 %v24, %v1707
    %v1709 = vmul.f32 %v25, %v1707
    %v1710 = vmul.f32 %v26, %v1707
    %v1711 = vmul.f32 %v27, %v1707
    %s1712 = sld [smem:[#allocation2 + $0xb]]
    %v1713 = vstv %s1712
    %v1714 = vmul.f32 %v24, %v1713
    %v1715 = vmul.f32 %v25, %v1713
    %v1716 = vmul.f32 %v26, %v1713
    %v1717 = vmul.f32 %v27, %v1713
    %1722 = vrot.lane.b32.xlu0 %v1714, 127
    %v1723 = vpop.permute.xlu0 %1722
    %1724 = vrot.lane.b32.xlu0 %v1715, 127
    %v1725 = vpop.permute.xlu0 %1724
    %1726 = vrot.lane.b32.xlu0 %v1716, 127
    %v1727 = vpop.permute.xlu0 %1726
    %1728 = vrot.lane.b32.xlu0 %v1717, 127
    %v1729 = vpop.permute.xlu0 %1728
    %v1734 = vadd.f32 %v1708, %v1723
    %v1735 = vadd.f32 %v1709, %v1725
    %v1736 = vadd.f32 %v1710, %v1727
    %v1737 = vadd.f32 %v1711, %v1729
    %s1738 = sld [smem:[#allocation2 + $0xe]]
    %v1739 = vstv %s1738
    %v1740 = vmul.f32 %v24, %v1739
    %v1741 = vmul.f32 %v25, %v1739
    %v1742 = vmul.f32 %v26, %v1739
    %v1743 = vmul.f32 %v27, %v1739
    %1748 = vrot.lane.b32.xlu0 %v1740, 126
    %v1749 = vpop.permute.xlu0 %1748
    %1750 = vrot.lane.b32.xlu0 %v1741, 126
    %v1751 = vpop.permute.xlu0 %1750
    %1752 = vrot.lane.b32.xlu0 %v1742, 126
    %v1753 = vpop.permute.xlu0 %1752
    %1754 = vrot.lane.b32.xlu0 %v1743, 126
    %v1755 = vpop.permute.xlu0 %1754
    %v1760 = vadd.f32 %v1734, %v1749
    %v1761 = vadd.f32 %v1735, %v1751
    %v1762 = vadd.f32 %v1736, %v1753
    %v1763 = vadd.f32 %v1737, %v1755
    %s1764 = sld [smem:[#allocation2 + $0x11]]
    %v1765 = vstv %s1764
    %v1766 = vadd.f32 %v1760, %v1765
    %v1767 = vadd.f32 %v1761, %v1765
    %v1768 = vadd.f32 %v1762, %v1765
    %v1769 = vadd.f32 %v1763, %v1765
    %1771 = vset.pattern.permute.xlu0 0
    %1772 = vperm.xlu0 %1771, %v1766
    %v1773 = vpop.permute.xlu0 %1772
    %1776 = vset.pattern.permute.xlu0 0
    %1777 = vperm.xlu0 %1776, %v1767
    %v1778 = vpop.permute.xlu0 %1777
    %1781 = vset.pattern.permute.xlu0 0
    %1782 = vperm.xlu0 %1781, %v1768
    %v1783 = vpop.permute.xlu0 %1782
    %1786 = vset.pattern.permute.xlu0 0
    %1787 = vperm.xlu0 %1786, %v1769
    %v1788 = vpop.permute.xlu0 %1787
    %v1790 = vmul.f32 %v1425, %v1773
    %v1791 = vmul.f32 %v1426, %v1778
    %v1792 = vmul.f32 %v1427, %v1783
    %v1793 = vmul.f32 %v1428, %v1788
    %v1794 = vsel %vm67, %v1790, 0.0
    %v1795 = vsel %vm67, %v1791, 0.0
    %v1796 = vadd.f32 %v1794, %v1795
    %v1797 = vsel %vm67, %v1792, 0.0
    %v1798 = vadd.f32 %v1796, %v1797
    %v1799 = vsel %vm67, %v1793, 0.0
    %v1800 = vadd.f32 %v1798, %v1799
    %v1801 = vrot.slane %v1800, 4
    %v1802 = vadd.f32 %v1800, %v1801
    %v1803 = vrot.slane %v1802, 2
    %v1804 = vadd.f32 %v1802, %v1803
    %v1805 = vrot.slane %v1804, 1
    %v1806 = vadd.f32 %v1804, %v1805
    %v1807 = vmul.f32 %v1806, 0.1
    %v1808 = vmul.f32 %v338, %v1773
    %v1809 = vmul.f32 %v340, %v1778
    %v1810 = vmul.f32 %v342, %v1783
    %v1811 = vmul.f32 %v344, %v1788
    %v1812 = vadd.f32 %v1808, %v1429
    %v1813 = vadd.f32 %v1809, %v1430
    %v1814 = vadd.f32 %v1810, %v1431
    %v1815 = vadd.f32 %v1811, %v1432
    %v1816 = vsel %vm67, %v1812, -inf
    %v1817 = vsel %vm67, %v1813, -inf
    %v1818 = vsel %vm67, %v1814, -inf
    %v1819 = vsel %vm67, %v1815, -inf
    %v1820 = vmax.f32 %v1816, %v1817
    %v1821 = vmax.f32 %v1818, %v1819
    %v1822 = vmax.f32 %v1820, %v1821
    %v1823 = vrot.slane %v1822, 4
    %v1824 = vmax.f32 %v1822, %v1823
    %v1825 = vrot.slane %v1824, 2
    %v1826 = vmax.f32 %v1824, %v1825
    %v1827 = vrot.slane %v1826, 1
    %v1828 = vmax.f32 %v1826, %v1827
    %s1829 = sld [smem:[#allocation2 + $0x17]]
    %v1830 = vstv %s1829
    %v1831 = vmul.f32 %v1807, %v1830
    %v1832 = vadd.f32 %v1705, %v1831
    %s1833 = sld [smem:[#allocation2 + $0x1a]]
    %v1834 = vstv %s1833
    %v1835 = vmul.f32 %v1828, %v1834
    %v1836 = vadd.f32 %v1832, %v1835
    %s1837 = sld [smem:[#allocation2 + $0x1b]]
    %v1838 = vstv %s1837
    %v1839 = vadd.f32 %v1836, %v1838
    %vm1840 = vcmask 253952
    %1841 = vst.msk [vmem:[%s2] sm:$0x1] %vm1840, %v1839
    // Predicated region
    $region14: #{gravnet_forward.1} parent=1 // pred_check
      _
    $region15: #{gravnet_forward.1} parent=1 // pred_check_branch
      %1843 = sbr.rel (0) target = $region17
    $region16: #{gravnet_forward.1} parent=1 // pred_region
      _
    $region17: #{gravnet_forward.1} parent=1 // pred_fallthru
      _
    // Predicated region
    $region18: #{gravnet_forward.1} parent=1 // pred_check
      _
    $region19: #{gravnet_forward.1} parent=1 // pred_check_branch
      %1845 = sbr.rel (0) target = $region21
    $region20: #{gravnet_forward.1} parent=1 // pred_region
      _
    $region21: #{gravnet_forward.1} parent=1 // pred_fallthru
      _
    %1846 = vsyncpa [#allocation3], 1

</llo_original>
